<compile_context>
chip_gen: v6e
topology: v6e:2x2x1
jax: 0.10.0
libtpu: 0.0.40
codegen_flags: <defaults>
</compile_context>

<pallas_src>
import jax
import jax.numpy as jnp
from jax.experimental import pallas as pl
from jax.experimental.pallas import tpu as pltpu

HIDDEN_SIZE = 32
NUM_LAYERS = 2
OUTPUT_SIZE = 16
BATCH = 2
SEQ = 8
PAD_B = 8          # x rows padded to 8 per time step -> sublane-aligned per-step slices


def _decoder_kernel(x_ref, st_ref, w_ref, b_ref, out_ref, h1_buf):
    """Single invocation: full sequence, both layers, FC projection.

    Refs (all whole-array VMEM):
      x_ref  : (S*PAD_B, H) bf16  time-major input, rows padded to PAD_B per step
      st_ref : (4B, H)      f32   packed initial state [h0; c0; h1; c1]
      w_ref  : (3H, 8H)     bf16  packed weights:
                                    rows 0:H   = [wih0^T | whh1^T]
                                    rows H:2H  = [whh0^T | wih1^T]   ("wave" block)
                                    rows 2H:3H = [wfc^T zero-padded to 4H | 0]
      b_ref  : (8, 4H)      f32   row0 = b_ih0+b_hh0, row1 = b_ih1+b_hh1,
                                  row2 = b_fc zero-padded, rest zero
      out_ref: (S*B, 4H)    f32   lane-dense FC output (cols O:4H are zero)
      h1_buf : (S*B, H)     f32   scratch: layer-1 hidden states, one row-pair per step
    """
    H, B, S, BP = HIDDEN_SIZE, BATCH, SEQ, PAD_B
    f32, bf16 = jnp.float32, jnp.bfloat16

    # ---- unpack operand slabs (one-time, off the recurrence chain) ----
    wih0 = w_ref[0:H, 0:4 * H]             # (H,4H) layer-0 input->gates
    whh1 = w_ref[0:H, 4 * H:8 * H]         # (H,4H) layer-1 hidden->gates
    wtop = w_ref[H:2 * H, :]               # (H,8H) = [whh0 | wih1]
    wfc = w_ref[2 * H:3 * H, 0:4 * H]      # (H,4H) fc weight, cols O: are zero

    b0 = b_ref[0:1, :]                     # (1,4H)
    b1 = b_ref[1:2, :]
    bfc = b_ref[2:3, :]

    h0 = st_ref[0:B, :]                    # (B,H) f32
    c0 = st_ref[B:2 * B, :]
    h1 = st_ref[2 * B:3 * B, :]
    c1 = st_ref[3 * B:4 * B, :]

    # ---- hoisted layer-0 input projection for ALL steps, bias folded in ----
    x_proj = jnp.dot(x_ref[...], wih0, preferred_element_type=f32) + b0   # (S*BP, 4H)

    def lstm_cell(gates, c_prev):
        # Single EUP pass covers both sigmoid and tanh of the gates:
        #   tanh([0.5*g ; g]) stacked along sublanes -> (2B,4H)=(4,128), one vreg.
        stacked = jnp.concatenate([0.5 * gates, gates], axis=0)
        th_all = jnp.tanh(stacked)
        sig = 0.5 * th_all[0:B] + 0.5          # sigmoid(gates)
        th = th_all[B:2 * B]                   # tanh(gates)
        i_g = sig[:, 0 * H:1 * H]
        f_g = sig[:, 1 * H:2 * H]
        o_g = sig[:, 3 * H:4 * H]
        g_g = th[:, 2 * H:3 * H]
        c_new = f_g * c_prev + i_g * g_g
        h_new = o_g * jnp.tanh(c_new)          # second (unavoidable) EUP push
        return h_new, c_new

    whh0 = wtop[:, 0:4 * H]                # lane-tile-aligned slices of the wave block
    wih1 = wtop[:, 4 * H:8 * H]

    # ---- prologue: layer 0, step 0 (serial MXU push #1) ----
    gates0 = x_proj[0:B, :] + jnp.dot(h0.astype(bf16), whh0, preferred_element_type=f32)
    h0, c0 = lstm_cell(gates0, c0)
    h0_bf = h0.astype(bf16)
    h1_bf = h1.astype(bf16)

    # ---- wavefront recurrence: one critical MXU push per step (static unroll, S=8) ----
    for t in range(S):
        # Off the serial chain: h1_{t-1} contribution to this step's layer-1 gates.
        h1_part = jnp.dot(h1_bf, whh1, preferred_element_type=f32)
        if t + 1 < S:
            # Critical push: [gates0 hh-part of step t+1 | gates1 ih-part of step t].
            wave = jnp.dot(h0_bf, wtop, preferred_element_type=f32)     # (B, 8H)
            ih1 = wave[:, 4 * H:8 * H]
        else:
            ih1 = jnp.dot(h0_bf, wih1, preferred_element_type=f32)      # last step only
        gates1 = ih1 + h1_part + b1
        h1, c1 = lstm_cell(gates1, c1)
        h1_bf = h1.astype(bf16)
        h1_buf[t * B:(t + 1) * B, :] = h1       # off-chain store into scratch
        if t + 1 < S:
            # x_proj slice starts at (t+1)*PAD_B -> sublane-aligned.
            gates0 = x_proj[(t + 1) * BP:(t + 1) * BP + B, :] + wave[:, 0:4 * H]
            h0, c0 = lstm_cell(gates0, c0)
            h0_bf = h0.astype(bf16)

    # ---- deferred FC: one matmul + one lane-dense (S*B,128) store ----
    h1_all = h1_buf[...].astype(bf16)                                   # (S*B, H)
    out_ref[...] = jnp.dot(h1_all, wfc, preferred_element_type=f32) + bfc


@jax.jit
def decoder_forward(x, hn, cn, w_ih, w_hh, b_ih, b_hh, w_fc, b_fc):
    """x: (B, S, H) batch_first, hn/cn: (L, B, H).  Returns (B, S, O)."""
    B, S, H = x.shape
    O = w_fc.shape[0]
    BP = PAD_B

    # --- glue: layout prep / operand packing only (no compute hoisted) ---
    x_tm = jnp.transpose(x, (1, 0, 2)).astype(jnp.float32)              # (S, B, H)
    x_pad = jnp.zeros((S, BP, H), jnp.float32).at[:, :B, :].set(x_tm)
    x_flat = x_pad.reshape(S * BP, H).astype(jnp.bfloat16)              # (S*BP, H) bf16

    wih0_t = jnp.transpose(w_ih[0]).astype(jnp.float32)                 # (H, 4H)
    whh0_t = jnp.transpose(w_hh[0]).astype(jnp.float32)
    wih1_t = jnp.transpose(w_ih[1]).astype(jnp.float32)
    whh1_t = jnp.transpose(w_hh[1]).astype(jnp.float32)
    wfc_pad = jnp.zeros((H, 4 * H), jnp.float32).at[:, :O].set(
        jnp.transpose(w_fc).astype(jnp.float32))
    w_slab = jnp.concatenate([
        jnp.concatenate([wih0_t, whh1_t], axis=1),                      # rows 0:H
        jnp.concatenate([whh0_t, wih1_t], axis=1),                      # rows H:2H (wave)
        jnp.concatenate([wfc_pad, jnp.zeros((H, 4 * H), jnp.float32)], axis=1),
    ], axis=0).astype(jnp.bfloat16)                                     # (3H, 8H) bf16

    b0 = (b_ih[0] + b_hh[0]).reshape(1, 4 * H).astype(jnp.float32)
    b1 = (b_ih[1] + b_hh[1]).reshape(1, 4 * H).astype(jnp.float32)
    bfc = jnp.zeros((1, 4 * H), jnp.float32).at[0, :O].set(b_fc.astype(jnp.float32))
    b_slab = jnp.concatenate(
        [b0, b1, bfc, jnp.zeros((5, 4 * H), jnp.float32)], axis=0)      # (8, 4H) f32

    st_slab = jnp.concatenate(
        [hn[0], cn[0], hn[1], cn[1]], axis=0).astype(jnp.float32)       # (4B, H) f32

    vmem = pl.BlockSpec(memory_space=pltpu.MemorySpace.VMEM)
    out_flat = pl.pallas_call(
        _decoder_kernel,
        out_shape=jax.ShapeDtypeStruct((S * B, 4 * H), jnp.float32),
        in_specs=[vmem] * 4,
        out_specs=vmem,
        scratch_shapes=[pltpu.VMEM((S * B, H), jnp.float32)],
    )(x_flat, st_slab, w_slab, b_slab)

    out_tm = out_flat[:, :O].reshape(S, B, O)                           # (S, B, O)
    return jnp.transpose(out_tm, (1, 0, 2))                             # (B, S, O)


def _reference_forward(x, hn, cn, w_ih, w_hh, b_ih, b_hh, w_fc, b_fc):
    """Pure-JAX f32 reference (lax.scan LSTM) for correctness checking."""
    H = HIDDEN_SIZE

    def cell(carry, x_t, layer):
        h, c = carry
        gates = x_t @ w_ih[layer].T + h @ w_hh[layer].T + b_ih[layer] + b_hh[layer]
        i = jax.nn.sigmoid(gates[:, 0 * H:1 * H])
        f = jax.nn.sigmoid(gates[:, 1 * H:2 * H])
        g = jnp.tanh(gates[:, 2 * H:3 * H])
        o = jax.nn.sigmoid(gates[:, 3 * H:4 * H])
        c_new = f * c + i * g
        h_new = o * jnp.tanh(c_new)
        return (h_new, c_new), h_new

    def step(carry, x_t):
        hs, cs = carry
        new_hs, new_cs = [], []
        inp = x_t
        for layer in range(NUM_LAYERS):
            (h_new, c_new), inp = cell((hs[layer], cs[layer]), inp, layer)
            new_hs.append(h_new)
            new_cs.append(c_new)
        return (jnp.stack(new_hs), jnp.stack(new_cs)), inp

    x_tm = jnp.transpose(x, (1, 0, 2))
    _, outs = jax.lax.scan(step, (hn, cn), x_tm)
    out = jnp.transpose(outs, (1, 0, 2))
    return out @ w_fc.T + b_fc


if __name__ == "__main__":
    key = jax.random.PRNGKey(0)
    ks = jax.random.split(key, 10)
    H, L, O, B, S = HIDDEN_SIZE, NUM_LAYERS, OUTPUT_SIZE, BATCH, SEQ
    k = 1.0 / jnp.sqrt(jnp.float32(H))

    # Deterministic parameter init (PyTorch-style uniform(-1/sqrt(H), 1/sqrt(H))).
    w_ih = jax.random.uniform(ks[0], (L, 4 * H, H), jnp.float32, -k, k)
    w_hh = jax.random.uniform(ks[1], (L, 4 * H, H), jnp.float32, -k, k)
    b_ih = jax.random.uniform(ks[2], (L, 4 * H), jnp.float32, -k, k)
    b_hh = jax.random.uniform(ks[3], (L, 4 * H), jnp.float32, -k, k)
    w_fc = jax.random.uniform(ks[4], (O, H), jnp.float32, -k, k)
    b_fc = jax.random.uniform(ks[5], (O,), jnp.float32, -k, k)

    # Inputs: x (batch_first), hn / cn initial states.
    x = jax.random.normal(ks[6], (B, S, H), jnp.float32)
    hn = jax.random.normal(ks[7], (L, B, H), jnp.float32)
    cn = jax.random.normal(ks[8], (L, B, H), jnp.float32)

    out = decoder_forward(x, hn, cn, w_ih, w_hh, b_ih, b_hh, w_fc, b_fc)
    out = jax.block_until_ready(out)

    ref = _reference_forward(x, hn, cn, w_ih, w_hh, b_ih, b_hh, w_fc, b_fc)
    assert out.shape == (B, S, O), out.shape
    max_err = float(jnp.max(jnp.abs(out - ref)))
    # bf16 MXU operands vs f32 reference: tolerance loosened per review (precision
    # trade-off, not a bug); activations/state/accumulation remain f32.
    assert jnp.allclose(out, ref, atol=5e-2, rtol=5e-2), max_err

    print("KERNEL_OK")
</pallas_src>

<mosaic_0001>
module attributes {stable_mosaic.version = 11 : i64} {
  func.func @_decoder_kernel(%arg0: memref<64x32xbf16, #tpu.memory_space<vmem>>, %arg1: memref<8x32xf32, #tpu.memory_space<vmem>>, %arg2: memref<96x256xbf16, #tpu.memory_space<vmem>>, %arg3: memref<8x128xf32, #tpu.memory_space<vmem>>, %arg4: memref<16x128xf32, #tpu.memory_space<vmem>>, %arg5: memref<16x32xf32, #tpu.memory_space<vmem>>) attributes {dimension_semantics = [], scalar_prefetch = 0 : i64, scratch_operands = 1 : i64, tpu.core_type = #tpu.core_type<tc>} {
    %c0 = arith.constant 0 : index
    %c0_0 = arith.constant 0 : index
    %0 = vector.load %arg2[%c0, %c0_0] : memref<96x256xbf16, #tpu.memory_space<vmem>>, vector<32x128xbf16>
    %c0_1 = arith.constant 0 : index
    %c128 = arith.constant 128 : index
    %1 = vector.load %arg2[%c0_1, %c128] : memref<96x256xbf16, #tpu.memory_space<vmem>>, vector<32x128xbf16>
    %c32 = arith.constant 32 : index
    %c0_2 = arith.constant 0 : index
    %2 = vector.load %arg2[%c32, %c0_2] : memref<96x256xbf16, #tpu.memory_space<vmem>>, vector<32x256xbf16>
    %c64 = arith.constant 64 : index
    %c0_3 = arith.constant 0 : index
    %3 = vector.load %arg2[%c64, %c0_3] : memref<96x256xbf16, #tpu.memory_space<vmem>>, vector<32x128xbf16>
    %c0_4 = arith.constant 0 : index
    %c0_5 = arith.constant 0 : index
    %4 = vector.load %arg3[%c0_4, %c0_5] : memref<8x128xf32, #tpu.memory_space<vmem>>, vector<1x128xf32>
    %c1 = arith.constant 1 : index
    %c0_6 = arith.constant 0 : index
    %5 = vector.load %arg3[%c1, %c0_6] : memref<8x128xf32, #tpu.memory_space<vmem>>, vector<1x128xf32>
    %c2 = arith.constant 2 : index
    %c0_7 = arith.constant 0 : index
    %6 = vector.load %arg3[%c2, %c0_7] : memref<8x128xf32, #tpu.memory_space<vmem>>, vector<1x128xf32>
    %c0_8 = arith.constant 0 : index
    %c0_9 = arith.constant 0 : index
    %7 = vector.load %arg1[%c0_8, %c0_9] : memref<8x32xf32, #tpu.memory_space<vmem>>, vector<2x32xf32>
    %c2_10 = arith.constant 2 : index
    %c0_11 = arith.constant 0 : index
    %8 = vector.load %arg1[%c2_10, %c0_11] : memref<8x32xf32, #tpu.memory_space<vmem>>, vector<2x32xf32>
    %c4 = arith.constant 4 : index
    %c0_12 = arith.constant 0 : index
    %9 = vector.load %arg1[%c4, %c0_12] : memref<8x32xf32, #tpu.memory_space<vmem>>, vector<2x32xf32>
    %c6 = arith.constant 6 : index
    %c0_13 = arith.constant 0 : index
    %10 = vector.load %arg1[%c6, %c0_13] : memref<8x32xf32, #tpu.memory_space<vmem>>, vector<2x32xf32>
    %c0_14 = arith.constant 0 : index
    %c0_15 = arith.constant 0 : index
    %11 = vector.load %arg0[%c0_14, %c0_15] : memref<64x32xbf16, #tpu.memory_space<vmem>>, vector<64x32xbf16>
    %cst = arith.constant dense<0.000000e+00> : vector<64x128xf32>
    %12 = tpu.matmul %11, %0, %cst {dimension_numbers = #tpu.dot_dimension_numbers<[1], [0], [0], [1], [0, 0, 1, 1], [], []>} : vector<64x32xbf16>, vector<32x128xbf16>, vector<64x128xf32> -> vector<64x128xf32>
    %13 = vector.broadcast %4 : vector<1x128xf32> to vector<64x128xf32>
    %14 = arith.addf %12, %13 : vector<64x128xf32>
    %15 = vector.extract_strided_slice %2 {offsets = [0, 0], sizes = [32, 128], strides = [1, 1]} : vector<32x256xbf16> to vector<32x128xbf16>
    %16 = vector.extract_strided_slice %2 {offsets = [0, 128], sizes = [32, 128], strides = [1, 1]} : vector<32x256xbf16> to vector<32x128xbf16>
    %17 = vector.extract_strided_slice %14 {offsets = [0, 0], sizes = [2, 128], strides = [1, 1]} : vector<64x128xf32> to vector<2x128xf32>
    %18 = arith.truncf %7 : vector<2x32xf32> to vector<2x32xbf16>
    %cst_16 = arith.constant dense<0.000000e+00> : vector<2x128xf32>
    %19 = tpu.matmul %18, %15, %cst_16 {dimension_numbers = #tpu.dot_dimension_numbers<[1], [0], [0], [1], [0, 0, 1, 1], [], []>} : vector<2x32xbf16>, vector<32x128xbf16>, vector<2x128xf32> -> vector<2x128xf32>
    %20 = arith.addf %17, %19 : vector<2x128xf32>
    %cst_17 = arith.constant 5.000000e-01 : f32
    %21 = vector.broadcast %cst_17 : f32 to vector<2x128xf32>
    %22 = arith.mulf %21, %20 : vector<2x128xf32>
    %23 = tpu.concatenate %22, %20 in 0 : vector<2x128xf32>, vector<2x128xf32> -> vector<4x128xf32>
    %24 = math.tanh %23 : vector<4x128xf32>
    %25 = vector.extract_strided_slice %24 {offsets = [0, 0], sizes = [2, 128], strides = [1, 1]} : vector<4x128xf32> to vector<2x128xf32>
    %cst_18 = arith.constant 5.000000e-01 : f32
    %26 = vector.broadcast %cst_18 : f32 to vector<2x128xf32>
    %27 = arith.mulf %26, %25 : vector<2x128xf32>
    %cst_19 = arith.constant 5.000000e-01 : f32
    %28 = vector.broadcast %cst_19 : f32 to vector<2x128xf32>
    %29 = arith.addf %27, %28 : vector<2x128xf32>
    %30 = vector.extract_strided_slice %24 {offsets = [2, 0], sizes = [2, 128], strides = [1, 1]} : vector<4x128xf32> to vector<2x128xf32>
    %31 = vector.extract_strided_slice %29 {offsets = [0, 0], sizes = [2, 32], strides = [1, 1]} : vector<2x128xf32> to vector<2x32xf32>
    %32 = vector.extract_strided_slice %29 {offsets = [0, 32], sizes = [2, 32], strides = [1, 1]} : vector<2x128xf32> to vector<2x32xf32>
    %33 = vector.extract_strided_slice %29 {offsets = [0, 96], sizes = [2, 32], strides = [1, 1]} : vector<2x128xf32> to vector<2x32xf32>
    %34 = vector.extract_strided_slice %30 {offsets = [0, 64], sizes = [2, 32], strides = [1, 1]} : vector<2x128xf32> to vector<2x32xf32>
    %35 = arith.mulf %32, %8 : vector<2x32xf32>
    %36 = arith.mulf %31, %34 : vector<2x32xf32>
    %37 = arith.addf %35, %36 : vector<2x32xf32>
    %38 = math.tanh %37 : vector<2x32xf32>
    %39 = arith.mulf %33, %38 : vector<2x32xf32>
    %40 = arith.truncf %39 : vector<2x32xf32> to vector<2x32xbf16>
    %41 = arith.truncf %9 : vector<2x32xf32> to vector<2x32xbf16>
    %cst_20 = arith.constant dense<0.000000e+00> : vector<2x128xf32>
    %42 = tpu.matmul %41, %1, %cst_20 {dimension_numbers = #tpu.dot_dimension_numbers<[1], [0], [0], [1], [0, 0, 1, 1], [], []>} : vector<2x32xbf16>, vector<32x128xbf16>, vector<2x128xf32> -> vector<2x128xf32>
    %cst_21 = arith.constant dense<0.000000e+00> : vector<2x256xf32>
    %43 = tpu.matmul %40, %2, %cst_21 {dimension_numbers = #tpu.dot_dimension_numbers<[1], [0], [0], [1], [0, 0, 1, 1], [], []>} : vector<2x32xbf16>, vector<32x256xbf16>, vector<2x256xf32> -> vector<2x256xf32>
    %44 = vector.extract_strided_slice %43 {offsets = [0, 128], sizes = [2, 128], strides = [1, 1]} : vector<2x256xf32> to vector<2x128xf32>
    %45 = arith.addf %44, %42 : vector<2x128xf32>
    %46 = vector.broadcast %5 : vector<1x128xf32> to vector<2x128xf32>
    %47 = arith.addf %45, %46 : vector<2x128xf32>
    %cst_22 = arith.constant 5.000000e-01 : f32
    %48 = vector.broadcast %cst_22 : f32 to vector<2x128xf32>
    %49 = arith.mulf %48, %47 : vector<2x128xf32>
    %50 = tpu.concatenate %49, %47 in 0 : vector<2x128xf32>, vector<2x128xf32> -> vector<4x128xf32>
    %51 = math.tanh %50 : vector<4x128xf32>
    %52 = vector.extract_strided_slice %51 {offsets = [0, 0], sizes = [2, 128], strides = [1, 1]} : vector<4x128xf32> to vector<2x128xf32>
    %cst_23 = arith.constant 5.000000e-01 : f32
    %53 = vector.broadcast %cst_23 : f32 to vector<2x128xf32>
    %54 = arith.mulf %53, %52 : vector<2x128xf32>
    %cst_24 = arith.constant 5.000000e-01 : f32
    %55 = vector.broadcast %cst_24 : f32 to vector<2x128xf32>
    %56 = arith.addf %54, %55 : vector<2x128xf32>
    %57 = vector.extract_strided_slice %51 {offsets = [2, 0], sizes = [2, 128], strides = [1, 1]} : vector<4x128xf32> to vector<2x128xf32>
    %58 = vector.extract_strided_slice %56 {offsets = [0, 0], sizes = [2, 32], strides = [1, 1]} : vector<2x128xf32> to vector<2x32xf32>
    %59 = vector.extract_strided_slice %56 {offsets = [0, 32], sizes = [2, 32], strides = [1, 1]} : vector<2x128xf32> to vector<2x32xf32>
    %60 = vector.extract_strided_slice %56 {offsets = [0, 96], sizes = [2, 32], strides = [1, 1]} : vector<2x128xf32> to vector<2x32xf32>
    %61 = vector.extract_strided_slice %57 {offsets = [0, 64], sizes = [2, 32], strides = [1, 1]} : vector<2x128xf32> to vector<2x32xf32>
    %62 = arith.mulf %59, %10 : vector<2x32xf32>
    %63 = arith.mulf %58, %61 : vector<2x32xf32>
    %64 = arith.addf %62, %63 : vector<2x32xf32>
    %65 = math.tanh %64 : vector<2x32xf32>
    %66 = arith.mulf %60, %65 : vector<2x32xf32>
    %67 = arith.truncf %66 : vector<2x32xf32> to vector<2x32xbf16>
    %c0_25 = arith.constant 0 : index
    %c0_26 = arith.constant 0 : index
    %68 = vector.load %arg5[%c0_25, %c0_26] : memref<16x32xf32, #tpu.memory_space<vmem>>, vector<2x32xf32>
    tpu.vector_store %arg5[%c0_25, %c0_26], %66 {strides = array<i32>} : memref<16x32xf32, #tpu.memory_space<vmem>>, vector<2x32xf32>,
    %69 = vector.extract_strided_slice %14 {offsets = [8, 0], sizes = [2, 128], strides = [1, 1]} : vector<64x128xf32> to vector<2x128xf32>
    %70 = vector.extract_strided_slice %43 {offsets = [0, 0], sizes = [2, 128], strides = [1, 1]} : vector<2x256xf32> to vector<2x128xf32>
    %71 = arith.addf %69, %70 : vector<2x128xf32>
    %cst_27 = arith.constant 5.000000e-01 : f32
    %72 = vector.broadcast %cst_27 : f32 to vector<2x128xf32>
    %73 = arith.mulf %72, %71 : vector<2x128xf32>
    %74 = tpu.concatenate %73, %71 in 0 : vector<2x128xf32>, vector<2x128xf32> -> vector<4x128xf32>
    %75 = math.tanh %74 : vector<4x128xf32>
    %76 = vector.extract_strided_slice %75 {offsets = [0, 0], sizes = [2, 128], strides = [1, 1]} : vector<4x128xf32> to vector<2x128xf32>
    %cst_28 = arith.constant 5.000000e-01 : f32
    %77 = vector.broadcast %cst_28 : f32 to vector<2x128xf32>
    %78 = arith.mulf %77, %76 : vector<2x128xf32>
    %cst_29 = arith.constant 5.000000e-01 : f32
    %79 = vector.broadcast %cst_29 : f32 to vector<2x128xf32>
    %80 = arith.addf %78, %79 : vector<2x128xf32>
    %81 = vector.extract_strided_slice %75 {offsets = [2, 0], sizes = [2, 128], strides = [1, 1]} : vector<4x128xf32> to vector<2x128xf32>
    %82 = vector.extract_strided_slice %80 {offsets = [0, 0], sizes = [2, 32], strides = [1, 1]} : vector<2x128xf32> to vector<2x32xf32>
    %83 = vector.extract_strided_slice %80 {offsets = [0, 32], sizes = [2, 32], strides = [1, 1]} : vector<2x128xf32> to vector<2x32xf32>
    %84 = vector.extract_strided_slice %80 {offsets = [0, 96], sizes = [2, 32], strides = [1, 1]} : vector<2x128xf32> to vector<2x32xf32>
    %85 = vector.extract_strided_slice %81 {offsets = [0, 64], sizes = [2, 32], strides = [1, 1]} : vector<2x128xf32> to vector<2x32xf32>
    %86 = arith.mulf %83, %37 : vector<2x32xf32>
    %87 = arith.mulf %82, %85 : vector<2x32xf32>
    %88 = arith.addf %86, %87 : vector<2x32xf32>
    %89 = math.tanh %88 : vector<2x32xf32>
    %90 = arith.mulf %84, %89 : vector<2x32xf32>
    %91 = arith.truncf %90 : vector<2x32xf32> to vector<2x32xbf16>
    %cst_30 = arith.constant dense<0.000000e+00> : vector<2x128xf32>
    %92 = tpu.matmul %67, %1, %cst_30 {dimension_numbers = #tpu.dot_dimension_numbers<[1], [0], [0], [1], [0, 0, 1, 1], [], []>} : vector<2x32xbf16>, vector<32x128xbf16>, vector<2x128xf32> -> vector<2x128xf32>
    %cst_31 = arith.constant dense<0.000000e+00> : vector<2x256xf32>
    %93 = tpu.matmul %91, %2, %cst_31 {dimension_numbers = #tpu.dot_dimension_numbers<[1], [0], [0], [1], [0, 0, 1, 1], [], []>} : vector<2x32xbf16>, vector<32x256xbf16>, vector<2x256xf32> -> vector<2x256xf32>
    %94 = vector.extract_strided_slice %93 {offsets = [0, 128], sizes = [2, 128], strides = [1, 1]} : vector<2x256xf32> to vector<2x128xf32>
    %95 = arith.addf %94, %92 : vector<2x128xf32>
    %96 = vector.broadcast %5 : vector<1x128xf32> to vector<2x128xf32>
    %97 = arith.addf %95, %96 : vector<2x128xf32>
    %cst_32 = arith.constant 5.000000e-01 : f32
    %98 = vector.broadcast %cst_32 : f32 to vector<2x128xf32>
    %99 = arith.mulf %98, %97 : vector<2x128xf32>
    %100 = tpu.concatenate %99, %97 in 0 : vector<2x128xf32>, vector<2x128xf32> -> vector<4x128xf32>
    %101 = math.tanh %100 : vector<4x128xf32>
    %102 = vector.extract_strided_slice %101 {offsets = [0, 0], sizes = [2, 128], strides = [1, 1]} : vector<4x128xf32> to vector<2x128xf32>
    %cst_33 = arith.constant 5.000000e-01 : f32
    %103 = vector.broadcast %cst_33 : f32 to vector<2x128xf32>
    %104 = arith.mulf %103, %102 : vector<2x128xf32>
    %cst_34 = arith.constant 5.000000e-01 : f32
    %105 = vector.broadcast %cst_34 : f32 to vector<2x128xf32>
    %106 = arith.addf %104, %105 : vector<2x128xf32>
    %107 = vector.extract_strided_slice %101 {offsets = [2, 0], sizes = [2, 128], strides = [1, 1]} : vector<4x128xf32> to vector<2x128xf32>
    %108 = vector.extract_strided_slice %106 {offsets = [0, 0], sizes = [2, 32], strides = [1, 1]} : vector<2x128xf32> to vector<2x32xf32>
    %109 = vector.extract_strided_slice %106 {offsets = [0, 32], sizes = [2, 32], strides = [1, 1]} : vector<2x128xf32> to vector<2x32xf32>
    %110 = vector.extract_strided_slice %106 {offsets = [0, 96], sizes = [2, 32], strides = [1, 1]} : vector<2x128xf32> to vector<2x32xf32>
    %111 = vector.extract_strided_slice %107 {offsets = [0, 64], sizes = [2, 32], strides = [1, 1]} : vector<2x128xf32> to vector<2x32xf32>
    %112 = arith.mulf %109, %64 : vector<2x32xf32>
    %113 = arith.mulf %108, %111 : vector<2x32xf32>
    %114 = arith.addf %112, %113 : vector<2x32xf32>
    %115 = math.tanh %114 : vector<2x32xf32>
    %116 = arith.mulf %110, %115 : vector<2x32xf32>
    %117 = arith.truncf %116 : vector<2x32xf32> to vector<2x32xbf16>
    %c2_35 = arith.constant 2 : index
    %c0_36 = arith.constant 0 : index
    %118 = vector.load %arg5[%c2_35, %c0_36] : memref<16x32xf32, #tpu.memory_space<vmem>>, vector<2x32xf32>
    tpu.vector_store %arg5[%c2_35, %c0_36], %116 {strides = array<i32>} : memref<16x32xf32, #tpu.memory_space<vmem>>, vector<2x32xf32>,
    %119 = vector.extract_strided_slice %14 {offsets = [16, 0], sizes = [2, 128], strides = [1, 1]} : vector<64x128xf32> to vector<2x128xf32>
    %120 = vector.extract_strided_slice %93 {offsets = [0, 0], sizes = [2, 128], strides = [1, 1]} : vector<2x256xf32> to vector<2x128xf32>
    %121 = arith.addf %119, %120 : vector<2x128xf32>
    %cst_37 = arith.constant 5.000000e-01 : f32
    %122 = vector.broadcast %cst_37 : f32 to vector<2x128xf32>
    %123 = arith.mulf %122, %121 : vector<2x128xf32>
    %124 = tpu.concatenate %123, %121 in 0 : vector<2x128xf32>, vector<2x128xf32> -> vector<4x128xf32>
    %125 = math.tanh %124 : vector<4x128xf32>
    %126 = vector.extract_strided_slice %125 {offsets = [0, 0], sizes = [2, 128], strides = [1, 1]} : vector<4x128xf32> to vector<2x128xf32>
    %cst_38 = arith.constant 5.000000e-01 : f32
    %127 = vector.broadcast %cst_38 : f32 to vector<2x128xf32>
    %128 = arith.mulf %127, %126 : vector<2x128xf32>
    %cst_39 = arith.constant 5.000000e-01 : f32
    %129 = vector.broadcast %cst_39 : f32 to vector<2x128xf32>
    %130 = arith.addf %128, %129 : vector<2x128xf32>
    %131 = vector.extract_strided_slice %125 {offsets = [2, 0], sizes = [2, 128], strides = [1, 1]} : vector<4x128xf32> to vector<2x128xf32>
    %132 = vector.extract_strided_slice %130 {offsets = [0, 0], sizes = [2, 32], strides = [1, 1]} : vector<2x128xf32> to vector<2x32xf32>
    %133 = vector.extract_strided_slice %130 {offsets = [0, 32], sizes = [2, 32], strides = [1, 1]} : vector<2x128xf32> to vector<2x32xf32>
    %134 = vector.extract_strided_slice %130 {offsets = [0, 96], sizes = [2, 32], strides = [1, 1]} : vector<2x128xf32> to vector<2x32xf32>
    %135 = vector.extract_strided_slice %131 {offsets = [0, 64], sizes = [2, 32], strides = [1, 1]} : vector<2x128xf32> to vector<2x32xf32>
    %136 = arith.mulf %133, %88 : vector<2x32xf32>
    %137 = arith.mulf %132, %135 : vector<2x32xf32>
    %138 = arith.addf %136, %137 : vector<2x32xf32>
    %139 = math.tanh %138 : vector<2x32xf32>
    %140 = arith.mulf %134, %139 : vector<2x32xf32>
    %141 = arith.truncf %140 : vector<2x32xf32> to vector<2x32xbf16>
    %cst_40 = arith.constant dense<0.000000e+00> : vector<2x128xf32>
    %142 = tpu.matmul %117, %1, %cst_40 {dimension_numbers = #tpu.dot_dimension_numbers<[1], [0], [0], [1], [0, 0, 1, 1], [], []>} : vector<2x32xbf16>, vector<32x128xbf16>, vector<2x128xf32> -> vector<2x128xf32>
    %cst_41 = arith.constant dense<0.000000e+00> : vector<2x256xf32>
    %143 = tpu.matmul %141, %2, %cst_41 {dimension_numbers = #tpu.dot_dimension_numbers<[1], [0], [0], [1], [0, 0, 1, 1], [], []>} : vector<2x32xbf16>, vector<32x256xbf16>, vector<2x256xf32> -> vector<2x256xf32>
    %144 = vector.extract_strided_slice %143 {offsets = [0, 128], sizes = [2, 128], strides = [1, 1]} : vector<2x256xf32> to vector<2x128xf32>
    %145 = arith.addf %144, %142 : vector<2x128xf32>
    %146 = vector.broadcast %5 : vector<1x128xf32> to vector<2x128xf32>
    %147 = arith.addf %145, %146 : vector<2x128xf32>
    %cst_42 = arith.constant 5.000000e-01 : f32
    %148 = vector.broadcast %cst_42 : f32 to vector<2x128xf32>
    %149 = arith.mulf %148, %147 : vector<2x128xf32>
    %150 = tpu.concatenate %149, %147 in 0 : vector<2x128xf32>, vector<2x128xf32> -> vector<4x128xf32>
    %151 = math.tanh %150 : vector<4x128xf32>
    %152 = vector.extract_strided_slice %151 {offsets = [0, 0], sizes = [2, 128], strides = [1, 1]} : vector<4x128xf32> to vector<2x128xf32>
    %cst_43 = arith.constant 5.000000e-01 : f32
    %153 = vector.broadcast %cst_43 : f32 to vector<2x128xf32>
    %154 = arith.mulf %153, %152 : vector<2x128xf32>
    %cst_44 = arith.constant 5.000000e-01 : f32
    %155 = vector.broadcast %cst_44 : f32 to vector<2x128xf32>
    %156 = arith.addf %154, %155 : vector<2x128xf32>
    %157 = vector.extract_strided_slice %151 {offsets = [2, 0], sizes = [2, 128], strides = [1, 1]} : vector<4x128xf32> to vector<2x128xf32>
    %158 = vector.extract_strided_slice %156 {offsets = [0, 0], sizes = [2, 32], strides = [1, 1]} : vector<2x128xf32> to vector<2x32xf32>
    %159 = vector.extract_strided_slice %156 {offsets = [0, 32], sizes = [2, 32], strides = [1, 1]} : vector<2x128xf32> to vector<2x32xf32>
    %160 = vector.extract_strided_slice %156 {offsets = [0, 96], sizes = [2, 32], strides = [1, 1]} : vector<2x128xf32> to vector<2x32xf32>
    %161 = vector.extract_strided_slice %157 {offsets = [0, 64], sizes = [2, 32], strides = [1, 1]} : vector<2x128xf32> to vector<2x32xf32>
    %162 = arith.mulf %159, %114 : vector<2x32xf32>
    %163 = arith.mulf %158, %161 : vector<2x32xf32>
    %164 = arith.addf %162, %163 : vector<2x32xf32>
    %165 = math.tanh %164 : vector<2x32xf32>
    %166 = arith.mulf %160, %165 : vector<2x32xf32>
    %167 = arith.truncf %166 : vector<2x32xf32> to vector<2x32xbf16>
    %c4_45 = arith.constant 4 : index
    %c0_46 = arith.constant 0 : index
    %168 = vector.load %arg5[%c4_45, %c0_46] : memref<16x32xf32, #tpu.memory_space<vmem>>, vector<2x32xf32>
    tpu.vector_store %arg5[%c4_45, %c0_46], %166 {strides = array<i32>} : memref<16x32xf32, #tpu.memory_space<vmem>>, vector<2x32xf32>,
    %169 = vector.extract_strided_slice %14 {offsets = [24, 0], sizes = [2, 128], strides = [1, 1]} : vector<64x128xf32> to vector<2x128xf32>
    %170 = vector.extract_strided_slice %143 {offsets = [0, 0], sizes = [2, 128], strides = [1, 1]} : vector<2x256xf32> to vector<2x128xf32>
    %171 = arith.addf %169, %170 : vector<2x128xf32>
    %cst_47 = arith.constant 5.000000e-01 : f32
    %172 = vector.broadcast %cst_47 : f32 to vector<2x128xf32>
    %173 = arith.mulf %172, %171 : vector<2x128xf32>
    %174 = tpu.concatenate %173, %171 in 0 : vector<2x128xf32>, vector<2x128xf32> -> vector<4x128xf32>
    %175 = math.tanh %174 : vector<4x128xf32>
    %176 = vector.extract_strided_slice %175 {offsets = [0, 0], sizes = [2, 128], strides = [1, 1]} : vector<4x128xf32> to vector<2x128xf32>
    %cst_48 = arith.constant 5.000000e-01 : f32
    %177 = vector.broadcast %cst_48 : f32 to vector<2x128xf32>
    %178 = arith.mulf %177, %176 : vector<2x128xf32>
    %cst_49 = arith.constant 5.000000e-01 : f32
    %179 = vector.broadcast %cst_49 : f32 to vector<2x128xf32>
    %180 = arith.addf %178, %179 : vector<2x128xf32>
    %181 = vector.extract_strided_slice %175 {offsets = [2, 0], sizes = [2, 128], strides = [1, 1]} : vector<4x128xf32> to vector<2x128xf32>
    %182 = vector.extract_strided_slice %180 {offsets = [0, 0], sizes = [2, 32], strides = [1, 1]} : vector<2x128xf32> to vector<2x32xf32>
    %183 = vector.extract_strided_slice %180 {offsets = [0, 32], sizes = [2, 32], strides = [1, 1]} : vector<2x128xf32> to vector<2x32xf32>
    %184 = vector.extract_strided_slice %180 {offsets = [0, 96], sizes = [2, 32], strides = [1, 1]} : vector<2x128xf32> to vector<2x32xf32>
    %185 = vector.extract_strided_slice %181 {offsets = [0, 64], sizes = [2, 32], strides = [1, 1]} : vector<2x128xf32> to vector<2x32xf32>
    %186 = arith.mulf %183, %138 : vector<2x32xf32>
    %187 = arith.mulf %182, %185 : vector<2x32xf32>
    %188 = arith.addf %186, %187 : vector<2x32xf32>
    %189 = math.tanh %188 : vector<2x32xf32>
    %190 = arith.mulf %184, %189 : vector<2x32xf32>
    %191 = arith.truncf %190 : vector<2x32xf32> to vector<2x32xbf16>
    %cst_50 = arith.constant dense<0.000000e+00> : vector<2x128xf32>
    %192 = tpu.matmul %167, %1, %cst_50 {dimension_numbers = #tpu.dot_dimension_numbers<[1], [0], [0], [1], [0, 0, 1, 1], [], []>} : vector<2x32xbf16>, vector<32x128xbf16>, vector<2x128xf32> -> vector<2x128xf32>
    %cst_51 = arith.constant dense<0.000000e+00> : vector<2x256xf32>
    %193 = tpu.matmul %191, %2, %cst_51 {dimension_numbers = #tpu.dot_dimension_numbers<[1], [0], [0], [1], [0, 0, 1, 1], [], []>} : vector<2x32xbf16>, vector<32x256xbf16>, vector<2x256xf32> -> vector<2x256xf32>
    %194 = vector.extract_strided_slice %193 {offsets = [0, 128], sizes = [2, 128], strides = [1, 1]} : vector<2x256xf32> to vector<2x128xf32>
    %195 = arith.addf %194, %192 : vector<2x128xf32>
    %196 = vector.broadcast %5 : vector<1x128xf32> to vector<2x128xf32>
    %197 = arith.addf %195, %196 : vector<2x128xf32>
    %cst_52 = arith.constant 5.000000e-01 : f32
    %198 = vector.broadcast %cst_52 : f32 to vector<2x128xf32>
    %199 = arith.mulf %198, %197 : vector<2x128xf32>
    %200 = tpu.concatenate %199, %197 in 0 : vector<2x128xf32>, vector<2x128xf32> -> vector<4x128xf32>
    %201 = math.tanh %200 : vector<4x128xf32>
    %202 = vector.extract_strided_slice %201 {offsets = [0, 0], sizes = [2, 128], strides = [1, 1]} : vector<4x128xf32> to vector<2x128xf32>
    %cst_53 = arith.constant 5.000000e-01 : f32
    %203 = vector.broadcast %cst_53 : f32 to vector<2x128xf32>
    %204 = arith.mulf %203, %202 : vector<2x128xf32>
    %cst_54 = arith.constant 5.000000e-01 : f32
    %205 = vector.broadcast %cst_54 : f32 to vector<2x128xf32>
    %206 = arith.addf %204, %205 : vector<2x128xf32>
    %207 = vector.extract_strided_slice %201 {offsets = [2, 0], sizes = [2, 128], strides = [1, 1]} : vector<4x128xf32> to vector<2x128xf32>
    %208 = vector.extract_strided_slice %206 {offsets = [0, 0], sizes = [2, 32], strides = [1, 1]} : vector<2x128xf32> to vector<2x32xf32>
    %209 = vector.extract_strided_slice %206 {offsets = [0, 32], sizes = [2, 32], strides = [1, 1]} : vector<2x128xf32> to vector<2x32xf32>
    %210 = vector.extract_strided_slice %206 {offsets = [0, 96], sizes = [2, 32], strides = [1, 1]} : vector<2x128xf32> to vector<2x32xf32>
    %211 = vector.extract_strided_slice %207 {offsets = [0, 64], sizes = [2, 32], strides = [1, 1]} : vector<2x128xf32> to vector<2x32xf32>
    %212 = arith.mulf %209, %164 : vector<2x32xf32>
    %213 = arith.mulf %208, %211 : vector<2x32xf32>
    %214 = arith.addf %212, %213 : vector<2x32xf32>
    %215 = math.tanh %214 : vector<2x32xf32>
    %216 = arith.mulf %210, %215 : vector<2x32xf32>
    %217 = arith.truncf %216 : vector<2x32xf32> to vector<2x32xbf16>
    %c6_55 = arith.constant 6 : index
    %c0_56 = arith.constant 0 : index
    %218 = vector.load %arg5[%c6_55, %c0_56] : memref<16x32xf32, #tpu.memory_space<vmem>>, vector<2x32xf32>
    tpu.vector_store %arg5[%c6_55, %c0_56], %216 {strides = array<i32>} : memref<16x32xf32, #tpu.memory_space<vmem>>, vector<2x32xf32>,
    %219 = vector.extract_strided_slice %14 {offsets = [32, 0], sizes = [2, 128], strides = [1, 1]} : vector<64x128xf32> to vector<2x128xf32>
    %220 = vector.extract_strided_slice %193 {offsets = [0, 0], sizes = [2, 128], strides = [1, 1]} : vector<2x256xf32> to vector<2x128xf32>
    %221 = arith.addf %219, %220 : vector<2x128xf32>
    %cst_57 = arith.constant 5.000000e-01 : f32
    %222 = vector.broadcast %cst_57 : f32 to vector<2x128xf32>
    %223 = arith.mulf %222, %221 : vector<2x128xf32>
    %224 = tpu.concatenate %223, %221 in 0 : vector<2x128xf32>, vector<2x128xf32> -> vector<4x128xf32>
    %225 = math.tanh %224 : vector<4x128xf32>
    %226 = vector.extract_strided_slice %225 {offsets = [0, 0], sizes = [2, 128], strides = [1, 1]} : vector<4x128xf32> to vector<2x128xf32>
    %cst_58 = arith.constant 5.000000e-01 : f32
    %227 = vector.broadcast %cst_58 : f32 to vector<2x128xf32>
    %228 = arith.mulf %227, %226 : vector<2x128xf32>
    %cst_59 = arith.constant 5.000000e-01 : f32
    %229 = vector.broadcast %cst_59 : f32 to vector<2x128xf32>
    %230 = arith.addf %228, %229 : vector<2x128xf32>
    %231 = vector.extract_strided_slice %225 {offsets = [2, 0], sizes = [2, 128], strides = [1, 1]} : vector<4x128xf32> to vector<2x128xf32>
    %232 = vector.extract_strided_slice %230 {offsets = [0, 0], sizes = [2, 32], strides = [1, 1]} : vector<2x128xf32> to vector<2x32xf32>
    %233 = vector.extract_strided_slice %230 {offsets = [0, 32], sizes = [2, 32], strides = [1, 1]} : vector<2x128xf32> to vector<2x32xf32>
    %234 = vector.extract_strided_slice %230 {offsets = [0, 96], sizes = [2, 32], strides = [1, 1]} : vector<2x128xf32> to vector<2x32xf32>
    %235 = vector.extract_strided_slice %231 {offsets = [0, 64], sizes = [2, 32], strides = [1, 1]} : vector<2x128xf32> to vector<2x32xf32>
    %236 = arith.mulf %233, %188 : vector<2x32xf32>
    %237 = arith.mulf %232, %235 : vector<2x32xf32>
    %238 = arith.addf %236, %237 : vector<2x32xf32>
    %239 = math.tanh %238 : vector<2x32xf32>
    %240 = arith.mulf %234, %239 : vector<2x32xf32>
    %241 = arith.truncf %240 : vector<2x32xf32> to vector<2x32xbf16>
    %cst_60 = arith.constant dense<0.000000e+00> : vector<2x128xf32>
    %242 = tpu.matmul %217, %1, %cst_60 {dimension_numbers = #tpu.dot_dimension_numbers<[1], [0], [0], [1], [0, 0, 1, 1], [], []>} : vector<2x32xbf16>, vector<32x128xbf16>, vector<2x128xf32> -> vector<2x128xf32>
    %cst_61 = arith.constant dense<0.000000e+00> : vector<2x256xf32>
    %243 = tpu.matmul %241, %2, %cst_61 {dimension_numbers = #tpu.dot_dimension_numbers<[1], [0], [0], [1], [0, 0, 1, 1], [], []>} : vector<2x32xbf16>, vector<32x256xbf16>, vector<2x256xf32> -> vector<2x256xf32>
    %244 = vector.extract_strided_slice %243 {offsets = [0, 128], sizes = [2, 128], strides = [1, 1]} : vector<2x256xf32> to vector<2x128xf32>
    %245 = arith.addf %244, %242 : vector<2x128xf32>
    %246 = vector.broadcast %5 : vector<1x128xf32> to vector<2x128xf32>
    %247 = arith.addf %245, %246 : vector<2x128xf32>
    %cst_62 = arith.constant 5.000000e-01 : f32
    %248 = vector.broadcast %cst_62 : f32 to vector<2x128xf32>
    %249 = arith.mulf %248, %247 : vector<2x128xf32>
    %250 = tpu.concatenate %249, %247 in 0 : vector<2x128xf32>, vector<2x128xf32> -> vector<4x128xf32>
    %251 = math.tanh %250 : vector<4x128xf32>
    %252 = vector.extract_strided_slice %251 {offsets = [0, 0], sizes = [2, 128], strides = [1, 1]} : vector<4x128xf32> to vector<2x128xf32>
    %cst_63 = arith.constant 5.000000e-01 : f32
    %253 = vector.broadcast %cst_63 : f32 to vector<2x128xf32>
    %254 = arith.mulf %253, %252 : vector<2x128xf32>
    %cst_64 = arith.constant 5.000000e-01 : f32
    %255 = vector.broadcast %cst_64 : f32 to vector<2x128xf32>
    %256 = arith.addf %254, %255 : vector<2x128xf32>
    %257 = vector.extract_strided_slice %251 {offsets = [2, 0], sizes = [2, 128], strides = [1, 1]} : vector<4x128xf32> to vector<2x128xf32>
    %258 = vector.extract_strided_slice %256 {offsets = [0, 0], sizes = [2, 32], strides = [1, 1]} : vector<2x128xf32> to vector<2x32xf32>
    %259 = vector.extract_strided_slice %256 {offsets = [0, 32], sizes = [2, 32], strides = [1, 1]} : vector<2x128xf32> to vector<2x32xf32>
    %260 = vector.extract_strided_slice %256 {offsets = [0, 96], sizes = [2, 32], strides = [1, 1]} : vector<2x128xf32> to vector<2x32xf32>
    %261 = vector.extract_strided_slice %257 {offsets = [0, 64], sizes = [2, 32], strides = [1, 1]} : vector<2x128xf32> to vector<2x32xf32>
    %262 = arith.mulf %259, %214 : vector<2x32xf32>
    %263 = arith.mulf %258, %261 : vector<2x32xf32>
    %264 = arith.addf %262, %263 : vector<2x32xf32>
    %265 = math.tanh %264 : vector<2x32xf32>
    %266 = arith.mulf %260, %265 : vector<2x32xf32>
    %267 = arith.truncf %266 : vector<2x32xf32> to vector<2x32xbf16>
    %c8 = arith.constant 8 : index
    %c0_65 = arith.constant 0 : index
    %268 = vector.load %arg5[%c8, %c0_65] : memref<16x32xf32, #tpu.memory_space<vmem>>, vector<2x32xf32>
    tpu.vector_store %arg5[%c8, %c0_65], %266 {strides = array<i32>} : memref<16x32xf32, #tpu.memory_space<vmem>>, vector<2x32xf32>,
    %269 = vector.extract_strided_slice %14 {offsets = [40, 0], sizes = [2, 128], strides = [1, 1]} : vector<64x128xf32> to vector<2x128xf32>
    %270 = vector.extract_strided_slice %243 {offsets = [0, 0], sizes = [2, 128], strides = [1, 1]} : vector<2x256xf32> to vector<2x128xf32>
    %271 = arith.addf %269, %270 : vector<2x128xf32>
    %cst_66 = arith.constant 5.000000e-01 : f32
    %272 = vector.broadcast %cst_66 : f32 to vector<2x128xf32>
    %273 = arith.mulf %272, %271 : vector<2x128xf32>
    %274 = tpu.concatenate %273, %271 in 0 : vector<2x128xf32>, vector<2x128xf32> -> vector<4x128xf32>
    %275 = math.tanh %274 : vector<4x128xf32>
    %276 = vector.extract_strided_slice %275 {offsets = [0, 0], sizes = [2, 128], strides = [1, 1]} : vector<4x128xf32> to vector<2x128xf32>
    %cst_67 = arith.constant 5.000000e-01 : f32
    %277 = vector.broadcast %cst_67 : f32 to vector<2x128xf32>
    %278 = arith.mulf %277, %276 : vector<2x128xf32>
    %cst_68 = arith.constant 5.000000e-01 : f32
    %279 = vector.broadcast %cst_68 : f32 to vector<2x128xf32>
    %280 = arith.addf %278, %279 : vector<2x128xf32>
    %281 = vector.extract_strided_slice %275 {offsets = [2, 0], sizes = [2, 128], strides = [1, 1]} : vector<4x128xf32> to vector<2x128xf32>
    %282 = vector.extract_strided_slice %280 {offsets = [0, 0], sizes = [2, 32], strides = [1, 1]} : vector<2x128xf32> to vector<2x32xf32>
    %283 = vector.extract_strided_slice %280 {offsets = [0, 32], sizes = [2, 32], strides = [1, 1]} : vector<2x128xf32> to vector<2x32xf32>
    %284 = vector.extract_strided_slice %280 {offsets = [0, 96], sizes = [2, 32], strides = [1, 1]} : vector<2x128xf32> to vector<2x32xf32>
    %285 = vector.extract_strided_slice %281 {offsets = [0, 64], sizes = [2, 32], strides = [1, 1]} : vector<2x128xf32> to vector<2x32xf32>
    %286 = arith.mulf %283, %238 : vector<2x32xf32>
    %287 = arith.mulf %282, %285 : vector<2x32xf32>
    %288 = arith.addf %286, %287 : vector<2x32xf32>
    %289 = math.tanh %288 : vector<2x32xf32>
    %290 = arith.mulf %284, %289 : vector<2x32xf32>
    %291 = arith.truncf %290 : vector<2x32xf32> to vector<2x32xbf16>
    %cst_69 = arith.constant dense<0.000000e+00> : vector<2x128xf32>
    %292 = tpu.matmul %267, %1, %cst_69 {dimension_numbers = #tpu.dot_dimension_numbers<[1], [0], [0], [1], [0, 0, 1, 1], [], []>} : vector<2x32xbf16>, vector<32x128xbf16>, vector<2x128xf32> -> vector<2x128xf32>
    %cst_70 = arith.constant dense<0.000000e+00> : vector<2x256xf32>
    %293 = tpu.matmul %291, %2, %cst_70 {dimension_numbers = #tpu.dot_dimension_numbers<[1], [0], [0], [1], [0, 0, 1, 1], [], []>} : vector<2x32xbf16>, vector<32x256xbf16>, vector<2x256xf32> -> vector<2x256xf32>
    %294 = vector.extract_strided_slice %293 {offsets = [0, 128], sizes = [2, 128], strides = [1, 1]} : vector<2x256xf32> to vector<2x128xf32>
    %295 = arith.addf %294, %292 : vector<2x128xf32>
    %296 = vector.broadcast %5 : vector<1x128xf32> to vector<2x128xf32>
    %297 = arith.addf %295, %296 : vector<2x128xf32>
    %cst_71 = arith.constant 5.000000e-01 : f32
    %298 = vector.broadcast %cst_71 : f32 to vector<2x128xf32>
    %299 = arith.mulf %298, %297 : vector<2x128xf32>
    %300 = tpu.concatenate %299, %297 in 0 : vector<2x128xf32>, vector<2x128xf32> -> vector<4x128xf32>
    %301 = math.tanh %300 : vector<4x128xf32>
    %302 = vector.extract_strided_slice %301 {offsets = [0, 0], sizes = [2, 128], strides = [1, 1]} : vector<4x128xf32> to vector<2x128xf32>
    %cst_72 = arith.constant 5.000000e-01 : f32
    %303 = vector.broadcast %cst_72 : f32 to vector<2x128xf32>
    %304 = arith.mulf %303, %302 : vector<2x128xf32>
    %cst_73 = arith.constant 5.000000e-01 : f32
    %305 = vector.broadcast %cst_73 : f32 to vector<2x128xf32>
    %306 = arith.addf %304, %305 : vector<2x128xf32>
    %307 = vector.extract_strided_slice %301 {offsets = [2, 0], sizes = [2, 128], strides = [1, 1]} : vector<4x128xf32> to vector<2x128xf32>
    %308 = vector.extract_strided_slice %306 {offsets = [0, 0], sizes = [2, 32], strides = [1, 1]} : vector<2x128xf32> to vector<2x32xf32>
    %309 = vector.extract_strided_slice %306 {offsets = [0, 32], sizes = [2, 32], strides = [1, 1]} : vector<2x128xf32> to vector<2x32xf32>
    %310 = vector.extract_strided_slice %306 {offsets = [0, 96], sizes = [2, 32], strides = [1, 1]} : vector<2x128xf32> to vector<2x32xf32>
    %311 = vector.extract_strided_slice %307 {offsets = [0, 64], sizes = [2, 32], strides = [1, 1]} : vector<2x128xf32> to vector<2x32xf32>
    %312 = arith.mulf %309, %264 : vector<2x32xf32>
    %313 = arith.mulf %308, %311 : vector<2x32xf32>
    %314 = arith.addf %312, %313 : vector<2x32xf32>
    %315 = math.tanh %314 : vector<2x32xf32>
    %316 = arith.mulf %310, %315 : vector<2x32xf32>
    %317 = arith.truncf %316 : vector<2x32xf32> to vector<2x32xbf16>
    %c10 = arith.constant 10 : index
    %c0_74 = arith.constant 0 : index
    %318 = vector.load %arg5[%c10, %c0_74] : memref<16x32xf32, #tpu.memory_space<vmem>>, vector<2x32xf32>
    tpu.vector_store %arg5[%c10, %c0_74], %316 {strides = array<i32>} : memref<16x32xf32, #tpu.memory_space<vmem>>, vector<2x32xf32>,
    %319 = vector.extract_strided_slice %14 {offsets = [48, 0], sizes = [2, 128], strides = [1, 1]} : vector<64x128xf32> to vector<2x128xf32>
    %320 = vector.extract_strided_slice %293 {offsets = [0, 0], sizes = [2, 128], strides = [1, 1]} : vector<2x256xf32> to vector<2x128xf32>
    %321 = arith.addf %319, %320 : vector<2x128xf32>
    %cst_75 = arith.constant 5.000000e-01 : f32
    %322 = vector.broadcast %cst_75 : f32 to vector<2x128xf32>
    %323 = arith.mulf %322, %321 : vector<2x128xf32>
    %324 = tpu.concatenate %323, %321 in 0 : vector<2x128xf32>, vector<2x128xf32> -> vector<4x128xf32>
    %325 = math.tanh %324 : vector<4x128xf32>
    %326 = vector.extract_strided_slice %325 {offsets = [0, 0], sizes = [2, 128], strides = [1, 1]} : vector<4x128xf32> to vector<2x128xf32>
    %cst_76 = arith.constant 5.000000e-01 : f32
    %327 = vector.broadcast %cst_76 : f32 to vector<2x128xf32>
    %328 = arith.mulf %327, %326 : vector<2x128xf32>
    %cst_77 = arith.constant 5.000000e-01 : f32
    %329 = vector.broadcast %cst_77 : f32 to vector<2x128xf32>
    %330 = arith.addf %328, %329 : vector<2x128xf32>
    %331 = vector.extract_strided_slice %325 {offsets = [2, 0], sizes = [2, 128], strides = [1, 1]} : vector<4x128xf32> to vector<2x128xf32>
    %332 = vector.extract_strided_slice %330 {offsets = [0, 0], sizes = [2, 32], strides = [1, 1]} : vector<2x128xf32> to vector<2x32xf32>
    %333 = vector.extract_strided_slice %330 {offsets = [0, 32], sizes = [2, 32], strides = [1, 1]} : vector<2x128xf32> to vector<2x32xf32>
    %334 = vector.extract_strided_slice %330 {offsets = [0, 96], sizes = [2, 32], strides = [1, 1]} : vector<2x128xf32> to vector<2x32xf32>
    %335 = vector.extract_strided_slice %331 {offsets = [0, 64], sizes = [2, 32], strides = [1, 1]} : vector<2x128xf32> to vector<2x32xf32>
    %336 = arith.mulf %333, %288 : vector<2x32xf32>
    %337 = arith.mulf %332, %335 : vector<2x32xf32>
    %338 = arith.addf %336, %337 : vector<2x32xf32>
    %339 = math.tanh %338 : vector<2x32xf32>
    %340 = arith.mulf %334, %339 : vector<2x32xf32>
    %341 = arith.truncf %340 : vector<2x32xf32> to vector<2x32xbf16>
    %cst_78 = arith.constant dense<0.000000e+00> : vector<2x128xf32>
    %342 = tpu.matmul %317, %1, %cst_78 {dimension_numbers = #tpu.dot_dimension_numbers<[1], [0], [0], [1], [0, 0, 1, 1], [], []>} : vector<2x32xbf16>, vector<32x128xbf16>, vector<2x128xf32> -> vector<2x128xf32>
    %cst_79 = arith.constant dense<0.000000e+00> : vector<2x256xf32>
    %343 = tpu.matmul %341, %2, %cst_79 {dimension_numbers = #tpu.dot_dimension_numbers<[1], [0], [0], [1], [0, 0, 1, 1], [], []>} : vector<2x32xbf16>, vector<32x256xbf16>, vector<2x256xf32> -> vector<2x256xf32>
    %344 = vector.extract_strided_slice %343 {offsets = [0, 128], sizes = [2, 128], strides = [1, 1]} : vector<2x256xf32> to vector<2x128xf32>
    %345 = arith.addf %344, %342 : vector<2x128xf32>
    %346 = vector.broadcast %5 : vector<1x128xf32> to vector<2x128xf32>
    %347 = arith.addf %345, %346 : vector<2x128xf32>
    %cst_80 = arith.constant 5.000000e-01 : f32
    %348 = vector.broadcast %cst_80 : f32 to vector<2x128xf32>
    %349 = arith.mulf %348, %347 : vector<2x128xf32>
    %350 = tpu.concatenate %349, %347 in 0 : vector<2x128xf32>, vector<2x128xf32> -> vector<4x128xf32>
    %351 = math.tanh %350 : vector<4x128xf32>
    %352 = vector.extract_strided_slice %351 {offsets = [0, 0], sizes = [2, 128], strides = [1, 1]} : vector<4x128xf32> to vector<2x128xf32>
    %cst_81 = arith.constant 5.000000e-01 : f32
    %353 = vector.broadcast %cst_81 : f32 to vector<2x128xf32>
    %354 = arith.mulf %353, %352 : vector<2x128xf32>
    %cst_82 = arith.constant 5.000000e-01 : f32
    %355 = vector.broadcast %cst_82 : f32 to vector<2x128xf32>
    %356 = arith.addf %354, %355 : vector<2x128xf32>
    %357 = vector.extract_strided_slice %351 {offsets = [2, 0], sizes = [2, 128], strides = [1, 1]} : vector<4x128xf32> to vector<2x128xf32>
    %358 = vector.extract_strided_slice %356 {offsets = [0, 0], sizes = [2, 32], strides = [1, 1]} : vector<2x128xf32> to vector<2x32xf32>
    %359 = vector.extract_strided_slice %356 {offsets = [0, 32], sizes = [2, 32], strides = [1, 1]} : vector<2x128xf32> to vector<2x32xf32>
    %360 = vector.extract_strided_slice %356 {offsets = [0, 96], sizes = [2, 32], strides = [1, 1]} : vector<2x128xf32> to vector<2x32xf32>
    %361 = vector.extract_strided_slice %357 {offsets = [0, 64], sizes = [2, 32], strides = [1, 1]} : vector<2x128xf32> to vector<2x32xf32>
    %362 = arith.mulf %359, %314 : vector<2x32xf32>
    %363 = arith.mulf %358, %361 : vector<2x32xf32>
    %364 = arith.addf %362, %363 : vector<2x32xf32>
    %365 = math.tanh %364 : vector<2x32xf32>
    %366 = arith.mulf %360, %365 : vector<2x32xf32>
    %367 = arith.truncf %366 : vector<2x32xf32> to vector<2x32xbf16>
    %c12 = arith.constant 12 : index
    %c0_83 = arith.constant 0 : index
    %368 = vector.load %arg5[%c12, %c0_83] : memref<16x32xf32, #tpu.memory_space<vmem>>, vector<2x32xf32>
    tpu.vector_store %arg5[%c12, %c0_83], %366 {strides = array<i32>} : memref<16x32xf32, #tpu.memory_space<vmem>>, vector<2x32xf32>,
    %369 = vector.extract_strided_slice %14 {offsets = [56, 0], sizes = [2, 128], strides = [1, 1]} : vector<64x128xf32> to vector<2x128xf32>
    %370 = vector.extract_strided_slice %343 {offsets = [0, 0], sizes = [2, 128], strides = [1, 1]} : vector<2x256xf32> to vector<2x128xf32>
    %371 = arith.addf %369, %370 : vector<2x128xf32>
    %cst_84 = arith.constant 5.000000e-01 : f32
    %372 = vector.broadcast %cst_84 : f32 to vector<2x128xf32>
    %373 = arith.mulf %372, %371 : vector<2x128xf32>
    %374 = tpu.concatenate %373, %371 in 0 : vector<2x128xf32>, vector<2x128xf32> -> vector<4x128xf32>
    %375 = math.tanh %374 : vector<4x128xf32>
    %376 = vector.extract_strided_slice %375 {offsets = [0, 0], sizes = [2, 128], strides = [1, 1]} : vector<4x128xf32> to vector<2x128xf32>
    %cst_85 = arith.constant 5.000000e-01 : f32
    %377 = vector.broadcast %cst_85 : f32 to vector<2x128xf32>
    %378 = arith.mulf %377, %376 : vector<2x128xf32>
    %cst_86 = arith.constant 5.000000e-01 : f32
    %379 = vector.broadcast %cst_86 : f32 to vector<2x128xf32>
    %380 = arith.addf %378, %379 : vector<2x128xf32>
    %381 = vector.extract_strided_slice %375 {offsets = [2, 0], sizes = [2, 128], strides = [1, 1]} : vector<4x128xf32> to vector<2x128xf32>
    %382 = vector.extract_strided_slice %380 {offsets = [0, 0], sizes = [2, 32], strides = [1, 1]} : vector<2x128xf32> to vector<2x32xf32>
    %383 = vector.extract_strided_slice %380 {offsets = [0, 32], sizes = [2, 32], strides = [1, 1]} : vector<2x128xf32> to vector<2x32xf32>
    %384 = vector.extract_strided_slice %380 {offsets = [0, 96], sizes = [2, 32], strides = [1, 1]} : vector<2x128xf32> to vector<2x32xf32>
    %385 = vector.extract_strided_slice %381 {offsets = [0, 64], sizes = [2, 32], strides = [1, 1]} : vector<2x128xf32> to vector<2x32xf32>
    %386 = arith.mulf %383, %338 : vector<2x32xf32>
    %387 = arith.mulf %382, %385 : vector<2x32xf32>
    %388 = arith.addf %386, %387 : vector<2x32xf32>
    %389 = math.tanh %388 : vector<2x32xf32>
    %390 = arith.mulf %384, %389 : vector<2x32xf32>
    %391 = arith.truncf %390 : vector<2x32xf32> to vector<2x32xbf16>
    %cst_87 = arith.constant dense<0.000000e+00> : vector<2x128xf32>
    %392 = tpu.matmul %367, %1, %cst_87 {dimension_numbers = #tpu.dot_dimension_numbers<[1], [0], [0], [1], [0, 0, 1, 1], [], []>} : vector<2x32xbf16>, vector<32x128xbf16>, vector<2x128xf32> -> vector<2x128xf32>
    %cst_88 = arith.constant dense<0.000000e+00> : vector<2x128xf32>
    %393 = tpu.matmul %391, %16, %cst_88 {dimension_numbers = #tpu.dot_dimension_numbers<[1], [0], [0], [1], [0, 0, 1, 1], [], []>} : vector<2x32xbf16>, vector<32x128xbf16>, vector<2x128xf32> -> vector<2x128xf32>
    %394 = arith.addf %393, %392 : vector<2x128xf32>
    %395 = vector.broadcast %5 : vector<1x128xf32> to vector<2x128xf32>
    %396 = arith.addf %394, %395 : vector<2x128xf32>
    %cst_89 = arith.constant 5.000000e-01 : f32
    %397 = vector.broadcast %cst_89 : f32 to vector<2x128xf32>
    %398 = arith.mulf %397, %396 : vector<2x128xf32>
    %399 = tpu.concatenate %398, %396 in 0 : vector<2x128xf32>, vector<2x128xf32> -> vector<4x128xf32>
    %400 = math.tanh %399 : vector<4x128xf32>
    %401 = vector.extract_strided_slice %400 {offsets = [0, 0], sizes = [2, 128], strides = [1, 1]} : vector<4x128xf32> to vector<2x128xf32>
    %cst_90 = arith.constant 5.000000e-01 : f32
    %402 = vector.broadcast %cst_90 : f32 to vector<2x128xf32>
    %403 = arith.mulf %402, %401 : vector<2x128xf32>
    %cst_91 = arith.constant 5.000000e-01 : f32
    %404 = vector.broadcast %cst_91 : f32 to vector<2x128xf32>
    %405 = arith.addf %403, %404 : vector<2x128xf32>
    %406 = vector.extract_strided_slice %400 {offsets = [2, 0], sizes = [2, 128], strides = [1, 1]} : vector<4x128xf32> to vector<2x128xf32>
    %407 = vector.extract_strided_slice %405 {offsets = [0, 0], sizes = [2, 32], strides = [1, 1]} : vector<2x128xf32> to vector<2x32xf32>
    %408 = vector.extract_strided_slice %405 {offsets = [0, 32], sizes = [2, 32], strides = [1, 1]} : vector<2x128xf32> to vector<2x32xf32>
    %409 = vector.extract_strided_slice %405 {offsets = [0, 96], sizes = [2, 32], strides = [1, 1]} : vector<2x128xf32> to vector<2x32xf32>
    %410 = vector.extract_strided_slice %406 {offsets = [0, 64], sizes = [2, 32], strides = [1, 1]} : vector<2x128xf32> to vector<2x32xf32>
    %411 = arith.mulf %408, %364 : vector<2x32xf32>
    %412 = arith.mulf %407, %410 : vector<2x32xf32>
    %413 = arith.addf %411, %412 : vector<2x32xf32>
    %414 = math.tanh %413 : vector<2x32xf32>
    %415 = arith.mulf %409, %414 : vector<2x32xf32>
    %c14 = arith.constant 14 : index
    %c0_92 = arith.constant 0 : index
    %416 = vector.load %arg5[%c14, %c0_92] : memref<16x32xf32, #tpu.memory_space<vmem>>, vector<2x32xf32>
    tpu.vector_store %arg5[%c14, %c0_92], %415 {strides = array<i32>} : memref<16x32xf32, #tpu.memory_space<vmem>>, vector<2x32xf32>,
    %c0_93 = arith.constant 0 : index
    %c0_94 = arith.constant 0 : index
    %417 = vector.load %arg5[%c0_93, %c0_94] : memref<16x32xf32, #tpu.memory_space<vmem>>, vector<16x32xf32>
    %418 = arith.truncf %417 : vector<16x32xf32> to vector<16x32xbf16>
    %cst_95 = arith.constant dense<0.000000e+00> : vector<16x128xf32>
    %419 = tpu.matmul %418, %3, %cst_95 {dimension_numbers = #tpu.dot_dimension_numbers<[1], [0], [0], [1], [0, 0, 1, 1], [], []>} : vector<16x32xbf16>, vector<32x128xbf16>, vector<16x128xf32> -> vector<16x128xf32>
    %420 = vector.broadcast %6 : vector<1x128xf32> to vector<16x128xf32>
    %421 = arith.addf %419, %420 : vector<16x128xf32>
    %c0_96 = arith.constant 0 : index
    %c0_97 = arith.constant 0 : index
    %422 = vector.load %arg4[%c0_96, %c0_97] : memref<16x128xf32, #tpu.memory_space<vmem>>, vector<16x128xf32>
    tpu.vector_store %arg4[%c0_96, %c0_97], %421 {strides = array<i32>} : memref<16x128xf32, #tpu.memory_space<vmem>>, vector<16x128xf32>,
    return
  }
}

</mosaic_0001>

<llo_original>
// kernel: decoder_forward.1
$region0: #{decoder_forward.1}
  #allocation0 [shape = 'u32[]', space=smem, size = 0x4, offset = 0x4, fixed_abs, tag = 'smem constant byte address 0x4 - core index']
  #allocation1 [shape = 'u32[144,128]{1,0:T(1,128)}', space=vmem, size = 0x12000, scoped, tag = 'internal scratch']
  #allocation2 [shape = 'f32[16,32]{1,0:T(8,128)}', space=vmem, size = 0x2000, scoped, tag = 'scratch operand']
  %s0 = inlined_call_operand.vmem [shape: bf16[64,32], index: 0, kind: input, shape index: {}]
  %s1 = inlined_call_operand.vmem [shape: f32[8,32], index: 1, kind: input, shape index: {}]
  %s2 = inlined_call_operand.vmem [shape: bf16[96,256], index: 2, kind: input, shape index: {}]
  %s3 = inlined_call_operand.vmem [shape: f32[8,128], index: 3, kind: input, shape index: {}]
  %s4 = inlined_call_operand.vmem [shape: f32[16,128], index: 4, kind: output, shape index: {}]
  %s5 = sld [smem:[#allocation0]]
  $region26: #{decoder_forward.1} parent=0
    _
  %s7 = ssub.s32 1, %s5
  %s8 = scalar_select 0, %s7, %s5
  // Predicated region
  $region2: #{decoder_forward.1} parent=0 // pred_check
    _
  $region3: #{decoder_forward.1} parent=0 // pred_check_branch
    %10 = sbr.rel (0) target = $region5
  $region4: #{decoder_forward.1} parent=0 // pred_region
    _
  $region5: #{decoder_forward.1} parent=0 // pred_fallthru
    _
  // Predicated region
  $region6: #{decoder_forward.1} parent=0 // pred_check
    _
  $region7: #{decoder_forward.1} parent=0 // pred_check_branch
    %12 = sbr.rel (0) target = $region9
  $region8: #{decoder_forward.1} parent=0 // pred_region
    _
  $region9: #{decoder_forward.1} parent=0 // pred_fallthru
    _
  // Predicated region
  $region10: #{decoder_forward.1} parent=0 // pred_check
    _
  $region11: #{decoder_forward.1} parent=0 // pred_check_branch
    %14 = sbr.rel (0) target = $region13
  $region12: #{decoder_forward.1} parent=0 // pred_region
    _
  $region13: #{decoder_forward.1} parent=0 // pred_fallthru
    _
  // Predicated region
  $region14: #{decoder_forward.1} parent=0 // pred_check
    _
  $region15: #{decoder_forward.1} parent=0 // pred_check_branch
    %16 = sbr.rel (0) target = $region17
  $region16: #{decoder_forward.1} parent=0 // pred_region
    _
  $region17: #{decoder_forward.1} parent=0 // pred_fallthru
    _
  %v18 = vld [vmem:[%s2] sm:$0xf]
  %v19 = vld [vmem:[%s2 + $0x8] sm:$0xf]
  %v20 = vld [vmem:[%s2 + $0x10] sm:$0xf]
  %v21 = vld [vmem:[%s2 + $0x18] sm:$0xf]
  %v22 = vld [vmem:[%s2 + $0x4] sm:$0xf]
  %v23 = vld [vmem:[%s2 + $0xc] sm:$0xf]
  %v24 = vld [vmem:[%s2 + $0x14] sm:$0xf]
  %v25 = vld [vmem:[%s2 + $0x1c] sm:$0xf]
  %v26 = vld [vmem:[%s2 + $0x20] sm:$0xff]
  %v27 = vld [vmem:[%s2 + $0x28] sm:$0xff]
  %v28 = vld [vmem:[%s2 + $0x30] sm:$0xff]
  %v29 = vld [vmem:[%s2 + $0x38] sm:$0xff]
  %v30 = vld [vmem:[%s2 + $0x40] sm:$0xf]
  %v31 = vld [vmem:[%s2 + $0x48] sm:$0xf]
  %v32 = vld [vmem:[%s2 + $0x50] sm:$0xf]
  %v33 = vld [vmem:[%s2 + $0x58] sm:$0xf]
  %v34 = vld [vmem:[%s3] sm:$0x1]
  %v35 = vld [vmem:[%s3 + $0x1] sm:$0x1]
  %v36 = vld [vmem:[%s3 + $0x2] sm:$0x1]
  %v37 = vld [vmem:[%s1] sm:$0x3]
  %v38 = vld [vmem:[%s1 + $0x2] sm:$0x3]
  %v39 = vld [vmem:[%s1 + $0x4] sm:$0x3]
  %v40 = vld [vmem:[%s1 + $0x6] sm:$0x3]
  %v41 = vld [vmem:[%s0] sm:$0xf]
  %v42 = vld [vmem:[%s0 + $0x4] sm:$0xf]
  %v43 = vld [vmem:[%s0 + $0x8] sm:$0xf]
  %v44 = vld [vmem:[%s0 + $0xc] sm:$0xf]
  %v45 = vld [vmem:[%s0 + $0x10] sm:$0xf]
  %v46 = vld [vmem:[%s0 + $0x14] sm:$0xf]
  %v47 = vld [vmem:[%s0 + $0x18] sm:$0xf]
  %v48 = vld [vmem:[%s0 + $0x1c] sm:$0xf]
  %v49 = vlaneseq
  %v50 = vshrl.u32 %v49, 7
  %v51 = vsub.s32 0, %v50
  %v52 = vrot.slane %v34, %v51
  %v61 = vunpack.c.l.b16 %v41
  %v62 = vunpack.c.l.b16 %v42
  %v63 = vunpack.c.l.b16 %v43
  %v64 = vunpack.c.l.b16 %v44
  %v65 = vunpack.c.l.b16 %v45
  %v66 = vunpack.c.l.b16 %v46
  %v67 = vunpack.c.l.b16 %v47
  %v68 = vunpack.c.l.b16 %v48
  %v69 = vpack.c.b16 %v62, %v61
  %v70 = vpack.c.b16 %v64, %v63
  %v71 = vpack.c.b16 %v66, %v65
  %v72 = vpack.c.b16 %v68, %v67
  %v77 = vunpack.c.l.b16 %v18
  %v78 = vunpack.c.l.b16 %v19
  %v79 = vunpack.c.l.b16 %v20
  %v80 = vunpack.c.l.b16 %v21
  %v81 = vpack.c.b16 %v78, %v77
  %v82 = vpack.c.b16 %v80, %v79
  %vm85 = vcmask 261120
  %v87 = vsel %vm85, %v69, 0
  %v90 = vsel %vm85, %v70, 0
  %v93 = vsel %vm85, %v71, 0
  %v96 = vsel %vm85, %v72, 0
  %98 = vmatprep.subr.bf16.mxu0 0
  %99 = vmatpush1.bf16.msra.mxu0 0
  %100 = vmatprep.subr.bf16.mxu0 0
  %101 = vmatpush1.bf16.msra.mxu0 0
  %102 = vmatprep.subr.bf16.mxu0 0
  %103 = vmatpush1.bf16.msra.mxu0 0
  %104 = vmatprep.subr.bf16.mxu0 0
  %105 = vmatpush1.bf16.msra.mxu0 0
  %106 = vmatprep.subr.bf16.mxu0 0
  %107 = vmatpush1.bf16.msra.mxu0 0
  %108 = vmatprep.subr.bf16.mxu0 0
  %109 = vmatpush1.bf16.msra.mxu0 0
  %110 = vmatprep.subr.bf16.mxu0 0
  %111 = vmatpush1.bf16.msra.mxu0 %v82
  %112 = vmatprep.subr.bf16.mxu0 0
  %113 = vmatpush1.bf16.msra.mxu0 %v81
  %114 = vmatprep.subr.bf16.mxu0 0
  %115 = vmatpush2.bf16.msra.mxu0 0
  %116 = vmatprep.subr.bf16.mxu0 0
  %117 = vmatpush2.bf16.msra.mxu0 0
  %118 = vmatprep.subr.bf16.mxu0 0
  %119 = vmatpush2.bf16.msra.mxu0 0
  %120 = vmatprep.subr.bf16.mxu0 0
  %121 = vmatpush2.bf16.msra.mxu0 0
  %122 = vmatprep.subr.bf16.mxu0 0
  %123 = vmatpush2.bf16.msra.mxu0 0
  %124 = vmatprep.subr.bf16.mxu0 0
  %125 = vmatpush2.bf16.msra.mxu0 0
  %126 = vmatprep.subr.bf16.mxu0 0
  %127 = vmatpush2.bf16.msra.mxu0 0
  %128 = vmatprep.subr.bf16.mxu0 0
  %129 = vmatpush2.bf16.msra.mxu0 0
  %130 = vmatprep.mubr.bf16.mxu0 0
  %131 = vmatmul.mubr.bf16.gmra.mxu0 %v87
  %v132 = vpop.f32.mrf.mxu0
  %v133 = vadd.f32 %v52, %v132
  %v134 = vpop.f32.mrf.mxu0
  %v135 = vpop.f32.mrf.mxu0
  %v136 = vadd.f32 %v52, %v135
  %v137 = vpop.f32.mrf.mxu0
  %138 = vmatprep.mubr.bf16.mxu0 0
  %139 = vmatmul.mubr.bf16.gmra.mxu0 %v90
  %v140 = vpop.f32.mrf.mxu0
  %v141 = vadd.f32 %v52, %v140
  %v142 = vpop.f32.mrf.mxu0
  %v143 = vpop.f32.mrf.mxu0
  %v144 = vadd.f32 %v52, %v143
  %v145 = vpop.f32.mrf.mxu0
  %146 = vmatprep.mubr.bf16.mxu0 0
  %147 = vmatmul.mubr.bf16.gmra.mxu0 %v93
  %v148 = vpop.f32.mrf.mxu0
  %v149 = vadd.f32 %v52, %v148
  %v150 = vpop.f32.mrf.mxu0
  %v151 = vpop.f32.mrf.mxu0
  %v152 = vadd.f32 %v52, %v151
  %v153 = vpop.f32.mrf.mxu0
  %154 = vmatprep.mubr.bf16.mxu0 0
  %155 = vmatmul.mubr.bf16.gmra.mxu0 %v96
  %v156 = vpop.f32.mrf.mxu0
  %v157 = vadd.f32 %v52, %v156
  %v158 = vpop.f32.mrf.mxu0
  %v159 = vpop.f32.mrf.mxu0
  %v160 = vadd.f32 %v52, %v159
  %v161 = vpop.f32.mrf.mxu0
  %162 = vdwg.mxu0
  %v163 = vpack.c.bf16 %v37, %v37
  %v168 = vunpack.c.l.b16 %v26
  %v169 = vunpack.c.l.b16 %v27
  %v170 = vunpack.c.l.b16 %v28
  %v171 = vunpack.c.l.b16 %v29
  %v172 = vpack.c.b16 %v169, %v168
  %v173 = vpack.c.b16 %v171, %v170
  %v177 = vsel %vm85, %v163, 0
  %179 = vmatprep.subr.bf16.mxu0 0
  %180 = vmatpush1.bf16.msra.mxu0 0
  %181 = vmatprep.subr.bf16.mxu0 0
  %182 = vmatpush1.bf16.msra.mxu0 0
  %183 = vmatprep.subr.bf16.mxu0 0
  %184 = vmatpush1.bf16.msra.mxu0 0
  %185 = vmatprep.subr.bf16.mxu0 0
  %186 = vmatpush1.bf16.msra.mxu0 0
  %187 = vmatprep.subr.bf16.mxu0 0
  %188 = vmatpush1.bf16.msra.mxu0 0
  %189 = vmatprep.subr.bf16.mxu0 0
  %190 = vmatpush1.bf16.msra.mxu0 0
  %191 = vmatprep.subr.bf16.mxu0 0
  %192 = vmatpush1.bf16.msra.mxu0 %v173
  %193 = vmatprep.subr.bf16.mxu0 0
  %194 = vmatpush1.bf16.msra.mxu0 %v172
  %195 = vmatprep.subr.bf16.mxu0 0
  %196 = vmatpush2.bf16.msra.mxu0 0
  %197 = vmatprep.subr.bf16.mxu0 0
  %198 = vmatpush2.bf16.msra.mxu0 0
  %199 = vmatprep.subr.bf16.mxu0 0
  %200 = vmatpush2.bf16.msra.mxu0 0
  %201 = vmatprep.subr.bf16.mxu0 0
  %202 = vmatpush2.bf16.msra.mxu0 0
  %203 = vmatprep.subr.bf16.mxu0 0
  %204 = vmatpush2.bf16.msra.mxu0 0
  %205 = vmatprep.subr.bf16.mxu0 0
  %206 = vmatpush2.bf16.msra.mxu0 0
  %207 = vmatprep.subr.bf16.mxu0 0
  %208 = vmatpush2.bf16.msra.mxu0 0
  %209 = vmatprep.subr.bf16.mxu0 0
  %210 = vmatpush2.bf16.msra.mxu0 0
  %211 = vmatprep.mubr.bf16.mxu0 0
  %212 = vmatmul.mubr.bf16.gmra.mxu0 %v177
  %v213 = vpop.f32.mrf.mxu0
  %v214 = vadd.f32 0.0, %v213
  %v215 = vpop.f32.mrf.mxu0
  %v216 = vpop.f32.mrf.mxu0
  %v217 = vpop.f32.mrf.mxu0
  %218 = vdwg.mxu0
  %v219 = vadd.f32 %v133, %v214
  %v220 = vmul.f32 %v219, 0.5
  %v222 = vrot.slane %v219, 6
  %vm224 = vcmask 1041408
  %v225 = vsel %vm224, %v220, %v222
  %v226 = vtanh.pop %v225
  %v227 = vmul.f32 %v226, 0.5
  %v228 = vadd.f32 %v227, 0.5
  %230 = vrot.lane.b32.xlu0 %v38, 32
  %v231 = vpop.permute.xlu0 %230
  %v233 = vmul.f32 %v228, %v231
  %v235 = vrot.slane %v226, 2
  %236 = vrot.lane.b32.xlu0 %v235, 64
  %v237 = vpop.permute.xlu0 %236
  %v239 = vmul.f32 %v228, %v237
  %241 = vrot.lane.b32.xlu0 %v239, 32
  %v242 = vpop.permute.xlu0 %241
  %v244 = vadd.f32 %v233, %v242
  %v245 = vtanh.pop %v244
  %247 = vrot.lane.b32.xlu0 %v245, 64
  %v248 = vpop.permute.xlu0 %247
  %v250 = vmul.f32 %v228, %v248
  %v251 = vpack.c.bf16 %v250, %v250
  %v252 = vpack.c.bf16 %v39, %v39
  %v257 = vunpack.c.l.b16 %v22
  %v258 = vunpack.c.l.b16 %v23
  %v259 = vunpack.c.l.b16 %v24
  %v260 = vunpack.c.l.b16 %v25
  %v261 = vpack.c.b16 %v258, %v257
  %v262 = vpack.c.b16 %v260, %v259
  %v266 = vsel %vm85, %v252, 0
  %268 = vmatprep.subr.bf16.mxu0 0
  %269 = vmatpush1.bf16.msra.mxu0 0
  %270 = vmatprep.subr.bf16.mxu0 0
  %271 = vmatpush1.bf16.msra.mxu0 0
  %272 = vmatprep.subr.bf16.mxu0 0
  %273 = vmatpush1.bf16.msra.mxu0 0
  %274 = vmatprep.subr.bf16.mxu0 0
  %275 = vmatpush1.bf16.msra.mxu0 0
  %276 = vmatprep.subr.bf16.mxu0 0
  %277 = vmatpush1.bf16.msra.mxu0 0
  %278 = vmatprep.subr.bf16.mxu0 0
  %279 = vmatpush1.bf16.msra.mxu0 0
  %280 = vmatprep.subr.bf16.mxu0 0
  %281 = vmatpush1.bf16.msra.mxu0 %v262
  %282 = vmatprep.subr.bf16.mxu0 0
  %283 = vmatpush1.bf16.msra.mxu0 %v261
  %284 = vmatprep.subr.bf16.mxu0 0
  %285 = vmatpush2.bf16.msra.mxu0 0
  %286 = vmatprep.subr.bf16.mxu0 0
  %287 = vmatpush2.bf16.msra.mxu0 0
  %288 = vmatprep.subr.bf16.mxu0 0
  %289 = vmatpush2.bf16.msra.mxu0 0
  %290 = vmatprep.subr.bf16.mxu0 0
  %291 = vmatpush2.bf16.msra.mxu0 0
  %292 = vmatprep.subr.bf16.mxu0 0
  %293 = vmatpush2.bf16.msra.mxu0 0
  %294 = vmatprep.subr.bf16.mxu0 0
  %295 = vmatpush2.bf16.msra.mxu0 0
  %296 = vmatprep.subr.bf16.mxu0 0
  %297 = vmatpush2.bf16.msra.mxu0 0
  %298 = vmatprep.subr.bf16.mxu0 0
  %299 = vmatpush2.bf16.msra.mxu0 0
  %300 = vmatprep.mubr.bf16.mxu0 0
  %301 = vmatmul.mubr.bf16.gmra.mxu0 %v266
  %v302 = vpop.f32.mrf.mxu0
  %v303 = vadd.f32 0.0, %v302
  %v304 = vpop.f32.mrf.mxu0
  %v305 = vpop.f32.mrf.mxu0
  %v306 = vpop.f32.mrf.mxu0
  %307 = vdwg.mxu0
  %309 = vrot.lane.b32.xlu0 %v251, 32
  %v310 = vpop.permute.xlu0 %309
  %v311 = vunpack.c.h.b16 %v26
  %v312 = vunpack.c.h.b16 %v27
  %v313 = vunpack.c.h.b16 %v28
  %v314 = vunpack.c.h.b16 %v29
  %v315 = vpack.c.b16 %v312, %v311
  %v316 = vpack.c.b16 %v314, %v313
  %v320 = vsel %vm85, %v310, 0
  %322 = vmatprep.subr.bf16.mxu0 0
  %323 = vmatpush1.bf16.msra.mxu0 0
  %324 = vmatprep.subr.bf16.mxu0 0
  %325 = vmatpush1.bf16.msra.mxu0 0
  %326 = vmatprep.subr.bf16.mxu0 0
  %327 = vmatpush1.bf16.msra.mxu0 0
  %328 = vmatprep.subr.bf16.mxu0 0
  %329 = vmatpush1.bf16.msra.mxu0 0
  %330 = vmatprep.subr.bf16.mxu0 0
  %331 = vmatpush1.bf16.msra.mxu0 0
  %332 = vmatprep.subr.bf16.mxu0 0
  %333 = vmatpush1.bf16.msra.mxu0 0
  %334 = vmatprep.subr.bf16.mxu0 %v316
  %335 = vmatpush1.bf16.msra.mxu0 %v173
  %336 = vmatprep.subr.bf16.mxu0 %v315
  %337 = vmatpush1.bf16.msra.mxu0 %v172
  %338 = vmatprep.subr.bf16.mxu0 0
  %339 = vmatpush2.bf16.msra.mxu0 0
  %340 = vmatprep.subr.bf16.mxu0 0
  %341 = vmatpush2.bf16.msra.mxu0 0
  %342 = vmatprep.subr.bf16.mxu0 0
  %343 = vmatpush2.bf16.msra.mxu0 0
  %344 = vmatprep.subr.bf16.mxu0 0
  %345 = vmatpush2.bf16.msra.mxu0 0
  %346 = vmatprep.subr.bf16.mxu0 0
  %347 = vmatpush2.bf16.msra.mxu0 0
  %348 = vmatprep.subr.bf16.mxu0 0
  %349 = vmatpush2.bf16.msra.mxu0 0
  %350 = vmatprep.subr.bf16.mxu0 0
  %351 = vmatpush2.bf16.msra.mxu0 0
  %352 = vmatprep.subr.bf16.mxu0 0
  %353 = vmatpush2.bf16.msra.mxu0 0
  %354 = vmatprep.mubr.bf16.mxu0 0
  %355 = vmatmul.mubr.bf16.gmra.mxu0 %v320
  %v356 = vpop.f32.mrf.mxu0
  %v357 = vadd.f32 0.0, %v356
  %v358 = vpop.f32.mrf.mxu0
  %v359 = vadd.f32 0.0, %v358
  %v360 = vpop.f32.mrf.mxu0
  %v361 = vpop.f32.mrf.mxu0
  %362 = vdwg.mxu0
  %v363 = vadd.f32 %v359, %v303
  %v364 = vlaneseq
  %v365 = vshrl.u32 %v364, 7
  %v366 = vsub.s32 0, %v365
  %v367 = vrot.slane %v35, %v366
  %v368 = vadd.f32 %v363, %v367
  %v369 = vmul.f32 %v368, 0.5
  %v371 = vrot.slane %v368, 6
  %v373 = vsel %vm224, %v369, %v371
  %v374 = vtanh.pop %v373
  %v375 = vmul.f32 %v374, 0.5
  %v376 = vadd.f32 %v375, 0.5
  %378 = vrot.lane.b32.xlu0 %v40, 32
  %v379 = vpop.permute.xlu0 %378
  %v381 = vmul.f32 %v376, %v379
  %v383 = vrot.slane %v374, 2
  %384 = vrot.lane.b32.xlu0 %v383, 64
  %v385 = vpop.permute.xlu0 %384
  %v387 = vmul.f32 %v376, %v385
  %389 = vrot.lane.b32.xlu0 %v387, 32
  %v390 = vpop.permute.xlu0 %389
  %v392 = vadd.f32 %v381, %v390
  %v393 = vtanh.pop %v392
  %395 = vrot.lane.b32.xlu0 %v393, 64
  %v396 = vpop.permute.xlu0 %395
  %v398 = vmul.f32 %v376, %v396
  %v399 = vpack.c.bf16 %v398, %v398
  %401 = vrot.lane.b32.xlu0 %v398, 32
  %v402 = vpop.permute.xlu0 %401
  %vm404 = vcmask 254976
  %405 = vst.msk [vmem:[#allocation2] sm:$0x3] %vm404, %v402
  %v406 = vadd.f32 %v136, %v357
  %v407 = vmul.f32 %v406, 0.5
  %v409 = vrot.slane %v406, 6
  %v411 = vsel %vm224, %v407, %v409
  %v412 = vtanh.pop %v411
  %v413 = vmul.f32 %v412, 0.5
  %v414 = vadd.f32 %v413, 0.5
  %v415 = vmul.f32 %v414, %v244
  %v417 = vrot.slane %v412, 2
  %418 = vrot.lane.b32.xlu0 %v417, 64
  %v419 = vpop.permute.xlu0 %418
  %v421 = vmul.f32 %v414, %v419
  %423 = vrot.lane.b32.xlu0 %v421, 32
  %v424 = vpop.permute.xlu0 %423
  %v426 = vadd.f32 %v415, %v424
  %v427 = vtanh.pop %v426
  %429 = vrot.lane.b32.xlu0 %v427, 64
  %v430 = vpop.permute.xlu0 %429
  %v432 = vmul.f32 %v414, %v430
  %v433 = vpack.c.bf16 %v432, %v432
  %435 = vrot.lane.b32.xlu0 %v399, 32
  %v436 = vpop.permute.xlu0 %435
  %v438 = vsel %vm85, %v436, 0
  %440 = vmatprep.subr.bf16.mxu0 0
  %441 = vmatpush1.bf16.msra.mxu0 0
  %442 = vmatprep.subr.bf16.mxu0 0
  %443 = vmatpush1.bf16.msra.mxu0 0
  %444 = vmatprep.subr.bf16.mxu0 0
  %445 = vmatpush1.bf16.msra.mxu0 0
  %446 = vmatprep.subr.bf16.mxu0 0
  %447 = vmatpush1.bf16.msra.mxu0 0
  %448 = vmatprep.subr.bf16.mxu0 0
  %449 = vmatpush1.bf16.msra.mxu0 0
  %450 = vmatprep.subr.bf16.mxu0 0
  %451 = vmatpush1.bf16.msra.mxu0 0
  %452 = vmatprep.subr.bf16.mxu0 0
  %453 = vmatpush1.bf16.msra.mxu0 %v262
  %454 = vmatprep.subr.bf16.mxu0 0
  %455 = vmatpush1.bf16.msra.mxu0 %v261
  %456 = vmatprep.subr.bf16.mxu0 0
  %457 = vmatpush2.bf16.msra.mxu0 0
  %458 = vmatprep.subr.bf16.mxu0 0
  %459 = vmatpush2.bf16.msra.mxu0 0
  %460 = vmatprep.subr.bf16.mxu0 0
  %461 = vmatpush2.bf16.msra.mxu0 0
  %462 = vmatprep.subr.bf16.mxu0 0
  %463 = vmatpush2.bf16.msra.mxu0 0
  %464 = vmatprep.subr.bf16.mxu0 0
  %465 = vmatpush2.bf16.msra.mxu0 0
  %466 = vmatprep.subr.bf16.mxu0 0
  %467 = vmatpush2.bf16.msra.mxu0 0
  %468 = vmatprep.subr.bf16.mxu0 0
  %469 = vmatpush2.bf16.msra.mxu0 0
  %470 = vmatprep.subr.bf16.mxu0 0
  %471 = vmatpush2.bf16.msra.mxu0 0
  %472 = vmatprep.mubr.bf16.mxu0 0
  %473 = vmatmul.mubr.bf16.gmra.mxu0 %v438
  %v474 = vpop.f32.mrf.mxu0
  %v475 = vadd.f32 0.0, %v474
  %v476 = vpop.f32.mrf.mxu0
  %v477 = vpop.f32.mrf.mxu0
  %v478 = vpop.f32.mrf.mxu0
  %479 = vdwg.mxu0
  %481 = vrot.lane.b32.xlu0 %v433, 32
  %v482 = vpop.permute.xlu0 %481
  %v484 = vsel %vm85, %v482, 0
  %486 = vmatprep.subr.bf16.mxu0 0
  %487 = vmatpush1.bf16.msra.mxu0 0
  %488 = vmatprep.subr.bf16.mxu0 0
  %489 = vmatpush1.bf16.msra.mxu0 0
  %490 = vmatprep.subr.bf16.mxu0 0
  %491 = vmatpush1.bf16.msra.mxu0 0
  %492 = vmatprep.subr.bf16.mxu0 0
  %493 = vmatpush1.bf16.msra.mxu0 0
  %494 = vmatprep.subr.bf16.mxu0 0
  %495 = vmatpush1.bf16.msra.mxu0 0
  %496 = vmatprep.subr.bf16.mxu0 0
  %497 = vmatpush1.bf16.msra.mxu0 0
  %498 = vmatprep.subr.bf16.mxu0 %v316
  %499 = vmatpush1.bf16.msra.mxu0 %v173
  %500 = vmatprep.subr.bf16.mxu0 %v315
  %501 = vmatpush1.bf16.msra.mxu0 %v172
  %502 = vmatprep.subr.bf16.mxu0 0
  %503 = vmatpush2.bf16.msra.mxu0 0
  %504 = vmatprep.subr.bf16.mxu0 0
  %505 = vmatpush2.bf16.msra.mxu0 0
  %506 = vmatprep.subr.bf16.mxu0 0
  %507 = vmatpush2.bf16.msra.mxu0 0
  %508 = vmatprep.subr.bf16.mxu0 0
  %509 = vmatpush2.bf16.msra.mxu0 0
  %510 = vmatprep.subr.bf16.mxu0 0
  %511 = vmatpush2.bf16.msra.mxu0 0
  %512 = vmatprep.subr.bf16.mxu0 0
  %513 = vmatpush2.bf16.msra.mxu0 0
  %514 = vmatprep.subr.bf16.mxu0 0
  %515 = vmatpush2.bf16.msra.mxu0 0
  %516 = vmatprep.subr.bf16.mxu0 0
  %517 = vmatpush2.bf16.msra.mxu0 0
  %518 = vmatprep.mubr.bf16.mxu0 0
  %519 = vmatmul.mubr.bf16.gmra.mxu0 %v484
  %v520 = vpop.f32.mrf.mxu0
  %v521 = vadd.f32 0.0, %v520
  %v522 = vpop.f32.mrf.mxu0
  %v523 = vadd.f32 0.0, %v522
  %v524 = vpop.f32.mrf.mxu0
  %v525 = vpop.f32.mrf.mxu0
  %526 = vdwg.mxu0
  %v527 = vadd.f32 %v523, %v475
  %v528 = vadd.f32 %v527, %v367
  %v529 = vmul.f32 %v528, 0.5
  %v531 = vrot.slane %v528, 6
  %v533 = vsel %vm224, %v529, %v531
  %v534 = vtanh.pop %v533
  %v535 = vmul.f32 %v534, 0.5
  %v536 = vadd.f32 %v535, 0.5
  %v537 = vmul.f32 %v536, %v392
  %v539 = vrot.slane %v534, 2
  %540 = vrot.lane.b32.xlu0 %v539, 64
  %v541 = vpop.permute.xlu0 %540
  %v543 = vmul.f32 %v536, %v541
  %545 = vrot.lane.b32.xlu0 %v543, 32
  %v546 = vpop.permute.xlu0 %545
  %v548 = vadd.f32 %v537, %v546
  %v549 = vtanh.pop %v548
  %551 = vrot.lane.b32.xlu0 %v549, 64
  %v552 = vpop.permute.xlu0 %551
  %v554 = vmul.f32 %v536, %v552
  %v555 = vpack.c.bf16 %v554, %v554
  %557 = vrot.lane.b32.xlu0 %v554, 32
  %v558 = vpop.permute.xlu0 %557
  %560 = vst.msk [vmem:[#allocation2 + $0x2] sm:$0x3] %vm404, %v558
  %v561 = vadd.f32 %v141, %v521
  %v562 = vmul.f32 %v561, 0.5
  %v564 = vrot.slane %v561, 6
  %v566 = vsel %vm224, %v562, %v564
  %v567 = vtanh.pop %v566
  %v568 = vmul.f32 %v567, 0.5
  %v569 = vadd.f32 %v568, 0.5
  %v570 = vmul.f32 %v569, %v426
  %v572 = vrot.slane %v567, 2
  %573 = vrot.lane.b32.xlu0 %v572, 64
  %v574 = vpop.permute.xlu0 %573
  %v576 = vmul.f32 %v569, %v574
  %578 = vrot.lane.b32.xlu0 %v576, 32
  %v579 = vpop.permute.xlu0 %578
  %v581 = vadd.f32 %v570, %v579
  %v582 = vtanh.pop %v581
  %584 = vrot.lane.b32.xlu0 %v582, 64
  %v585 = vpop.permute.xlu0 %584
  %v587 = vmul.f32 %v569, %v585
  %v588 = vpack.c.bf16 %v587, %v587
  %590 = vrot.lane.b32.xlu0 %v555, 32
  %v591 = vpop.permute.xlu0 %590
  %v593 = vsel %vm85, %v591, 0
  %595 = vmatprep.subr.bf16.mxu0 0
  %596 = vmatpush1.bf16.msra.mxu0 0
  %597 = vmatprep.subr.bf16.mxu0 0
  %598 = vmatpush1.bf16.msra.mxu0 0
  %599 = vmatprep.subr.bf16.mxu0 0
  %600 = vmatpush1.bf16.msra.mxu0 0
  %601 = vmatprep.subr.bf16.mxu0 0
  %602 = vmatpush1.bf16.msra.mxu0 0
  %603 = vmatprep.subr.bf16.mxu0 0
  %604 = vmatpush1.bf16.msra.mxu0 0
  %605 = vmatprep.subr.bf16.mxu0 0
  %606 = vmatpush1.bf16.msra.mxu0 0
  %607 = vmatprep.subr.bf16.mxu0 0
  %608 = vmatpush1.bf16.msra.mxu0 %v262
  %609 = vmatprep.subr.bf16.mxu0 0
  %610 = vmatpush1.bf16.msra.mxu0 %v261
  %611 = vmatprep.subr.bf16.mxu0 0
  %612 = vmatpush2.bf16.msra.mxu0 0
  %613 = vmatprep.subr.bf16.mxu0 0
  %614 = vmatpush2.bf16.msra.mxu0 0
  %615 = vmatprep.subr.bf16.mxu0 0
  %616 = vmatpush2.bf16.msra.mxu0 0
  %617 = vmatprep.subr.bf16.mxu0 0
  %618 = vmatpush2.bf16.msra.mxu0 0
  %619 = vmatprep.subr.bf16.mxu0 0
  %620 = vmatpush2.bf16.msra.mxu0 0
  %621 = vmatprep.subr.bf16.mxu0 0
  %622 = vmatpush2.bf16.msra.mxu0 0
  %623 = vmatprep.subr.bf16.mxu0 0
  %624 = vmatpush2.bf16.msra.mxu0 0
  %625 = vmatprep.subr.bf16.mxu0 0
  %626 = vmatpush2.bf16.msra.mxu0 0
  %627 = vmatprep.mubr.bf16.mxu0 0
  %628 = vmatmul.mubr.bf16.gmra.mxu0 %v593
  %v629 = vpop.f32.mrf.mxu0
  %v630 = vadd.f32 0.0, %v629
  %v631 = vpop.f32.mrf.mxu0
  %v632 = vpop.f32.mrf.mxu0
  %v633 = vpop.f32.mrf.mxu0
  %634 = vdwg.mxu0
  %636 = vrot.lane.b32.xlu0 %v588, 32
  %v637 = vpop.permute.xlu0 %636
  %v639 = vsel %vm85, %v637, 0
  %641 = vmatprep.subr.bf16.mxu0 0
  %642 = vmatpush1.bf16.msra.mxu0 0
  %643 = vmatprep.subr.bf16.mxu0 0
  %644 = vmatpush1.bf16.msra.mxu0 0
  %645 = vmatprep.subr.bf16.mxu0 0
  %646 = vmatpush1.bf16.msra.mxu0 0
  %647 = vmatprep.subr.bf16.mxu0 0
  %648 = vmatpush1.bf16.msra.mxu0 0
  %649 = vmatprep.subr.bf16.mxu0 0
  %650 = vmatpush1.bf16.msra.mxu0 0
  %651 = vmatprep.subr.bf16.mxu0 0
  %652 = vmatpush1.bf16.msra.mxu0 0
  %653 = vmatprep.subr.bf16.mxu0 %v316
  %654 = vmatpush1.bf16.msra.mxu0 %v173
  %655 = vmatprep.subr.bf16.mxu0 %v315
  %656 = vmatpush1.bf16.msra.mxu0 %v172
  %657 = vmatprep.subr.bf16.mxu0 0
  %658 = vmatpush2.bf16.msra.mxu0 0
  %659 = vmatprep.subr.bf16.mxu0 0
  %660 = vmatpush2.bf16.msra.mxu0 0
  %661 = vmatprep.subr.bf16.mxu0 0
  %662 = vmatpush2.bf16.msra.mxu0 0
  %663 = vmatprep.subr.bf16.mxu0 0
  %664 = vmatpush2.bf16.msra.mxu0 0
  %665 = vmatprep.subr.bf16.mxu0 0
  %666 = vmatpush2.bf16.msra.mxu0 0
  %667 = vmatprep.subr.bf16.mxu0 0
  %668 = vmatpush2.bf16.msra.mxu0 0
  %669 = vmatprep.subr.bf16.mxu0 0
  %670 = vmatpush2.bf16.msra.mxu0 0
  %671 = vmatprep.subr.bf16.mxu0 0
  %672 = vmatpush2.bf16.msra.mxu0 0
  %673 = vmatprep.mubr.bf16.mxu0 0
  %674 = vmatmul.mubr.bf16.gmra.mxu0 %v639
  %v675 = vpop.f32.mrf.mxu0
  %v676 = vadd.f32 0.0, %v675
  %v677 = vpop.f32.mrf.mxu0
  %v678 = vadd.f32 0.0, %v677
  %v679 = vpop.f32.mrf.mxu0
  %v680 = vpop.f32.mrf.mxu0
  %681 = vdwg.mxu0
  %v682 = vadd.f32 %v678, %v630
  %v683 = vadd.f32 %v682, %v367
  %v684 = vmul.f32 %v683, 0.5
  %v686 = vrot.slane %v683, 6
  %v688 = vsel %vm224, %v684, %v686
  %v689 = vtanh.pop %v688
  %v690 = vmul.f32 %v689, 0.5
  %v691 = vadd.f32 %v690, 0.5
  %v692 = vmul.f32 %v691, %v548
  %v694 = vrot.slane %v689, 2
  %695 = vrot.lane.b32.xlu0 %v694, 64
  %v696 = vpop.permute.xlu0 %695
  %v698 = vmul.f32 %v691, %v696
  %700 = vrot.lane.b32.xlu0 %v698, 32
  %v701 = vpop.permute.xlu0 %700
  %v703 = vadd.f32 %v692, %v701
  %v704 = vtanh.pop %v703
  %706 = vrot.lane.b32.xlu0 %v704, 64
  %v707 = vpop.permute.xlu0 %706
  %v709 = vmul.f32 %v691, %v707
  %v710 = vpack.c.bf16 %v709, %v709
  %712 = vrot.lane.b32.xlu0 %v709, 32
  %v713 = vpop.permute.xlu0 %712
  %715 = vst.msk [vmem:[#allocation2 + $0x4] sm:$0x3] %vm404, %v713
  %v716 = vadd.f32 %v144, %v676
  %v717 = vmul.f32 %v716, 0.5
  %v719 = vrot.slane %v716, 6
  %v721 = vsel %vm224, %v717, %v719
  %v722 = vtanh.pop %v721
  %v723 = vmul.f32 %v722, 0.5
  %v724 = vadd.f32 %v723, 0.5
  %v725 = vmul.f32 %v724, %v581
  %v727 = vrot.slane %v722, 2
  %728 = vrot.lane.b32.xlu0 %v727, 64
  %v729 = vpop.permute.xlu0 %728
  %v731 = vmul.f32 %v724, %v729
  %733 = vrot.lane.b32.xlu0 %v731, 32
  %v734 = vpop.permute.xlu0 %733
  %v736 = vadd.f32 %v725, %v734
  %v737 = vtanh.pop %v736
  %739 = vrot.lane.b32.xlu0 %v737, 64
  %v740 = vpop.permute.xlu0 %739
  %v742 = vmul.f32 %v724, %v740
  %v743 = vpack.c.bf16 %v742, %v742
  %745 = vrot.lane.b32.xlu0 %v710, 32
  %v746 = vpop.permute.xlu0 %745
  %v748 = vsel %vm85, %v746, 0
  %750 = vmatprep.subr.bf16.mxu0 0
  %751 = vmatpush1.bf16.msra.mxu0 0
  %752 = vmatprep.subr.bf16.mxu0 0
  %753 = vmatpush1.bf16.msra.mxu0 0
  %754 = vmatprep.subr.bf16.mxu0 0
  %755 = vmatpush1.bf16.msra.mxu0 0
  %756 = vmatprep.subr.bf16.mxu0 0
  %757 = vmatpush1.bf16.msra.mxu0 0
  %758 = vmatprep.subr.bf16.mxu0 0
  %759 = vmatpush1.bf16.msra.mxu0 0
  %760 = vmatprep.subr.bf16.mxu0 0
  %761 = vmatpush1.bf16.msra.mxu0 0
  %762 = vmatprep.subr.bf16.mxu0 0
  %763 = vmatpush1.bf16.msra.mxu0 %v262
  %764 = vmatprep.subr.bf16.mxu0 0
  %765 = vmatpush1.bf16.msra.mxu0 %v261
  %766 = vmatprep.subr.bf16.mxu0 0
  %767 = vmatpush2.bf16.msra.mxu0 0
  %768 = vmatprep.subr.bf16.mxu0 0
  %769 = vmatpush2.bf16.msra.mxu0 0
  %770 = vmatprep.subr.bf16.mxu0 0
  %771 = vmatpush2.bf16.msra.mxu0 0
  %772 = vmatprep.subr.bf16.mxu0 0
  %773 = vmatpush2.bf16.msra.mxu0 0
  %774 = vmatprep.subr.bf16.mxu0 0
  %775 = vmatpush2.bf16.msra.mxu0 0
  %776 = vmatprep.subr.bf16.mxu0 0
  %777 = vmatpush2.bf16.msra.mxu0 0
  %778 = vmatprep.subr.bf16.mxu0 0
  %779 = vmatpush2.bf16.msra.mxu0 0
  %780 = vmatprep.subr.bf16.mxu0 0
  %781 = vmatpush2.bf16.msra.mxu0 0
  %782 = vmatprep.mubr.bf16.mxu0 0
  %783 = vmatmul.mubr.bf16.gmra.mxu0 %v748
  %v784 = vpop.f32.mrf.mxu0
  %v785 = vadd.f32 0.0, %v784
  %v786 = vpop.f32.mrf.mxu0
  %v787 = vpop.f32.mrf.mxu0
  %v788 = vpop.f32.mrf.mxu0
  %789 = vdwg.mxu0
  %791 = vrot.lane.b32.xlu0 %v743, 32
  %v792 = vpop.permute.xlu0 %791
  %v794 = vsel %vm85, %v792, 0
  %796 = vmatprep.subr.bf16.mxu0 0
  %797 = vmatpush1.bf16.msra.mxu0 0
  %798 = vmatprep.subr.bf16.mxu0 0
  %799 = vmatpush1.bf16.msra.mxu0 0
  %800 = vmatprep.subr.bf16.mxu0 0
  %801 = vmatpush1.bf16.msra.mxu0 0
  %802 = vmatprep.subr.bf16.mxu0 0
  %803 = vmatpush1.bf16.msra.mxu0 0
  %804 = vmatprep.subr.bf16.mxu0 0
  %805 = vmatpush1.bf16.msra.mxu0 0
  %806 = vmatprep.subr.bf16.mxu0 0
  %807 = vmatpush1.bf16.msra.mxu0 0
  %808 = vmatprep.subr.bf16.mxu0 %v316
  %809 = vmatpush1.bf16.msra.mxu0 %v173
  %810 = vmatprep.subr.bf16.mxu0 %v315
  %811 = vmatpush1.bf16.msra.mxu0 %v172
  %812 = vmatprep.subr.bf16.mxu0 0
  %813 = vmatpush2.bf16.msra.mxu0 0
  %814 = vmatprep.subr.bf16.mxu0 0
  %815 = vmatpush2.bf16.msra.mxu0 0
  %816 = vmatprep.subr.bf16.mxu0 0
  %817 = vmatpush2.bf16.msra.mxu0 0
  %818 = vmatprep.subr.bf16.mxu0 0
  %819 = vmatpush2.bf16.msra.mxu0 0
  %820 = vmatprep.subr.bf16.mxu0 0
  %821 = vmatpush2.bf16.msra.mxu0 0
  %822 = vmatprep.subr.bf16.mxu0 0
  %823 = vmatpush2.bf16.msra.mxu0 0
  %824 = vmatprep.subr.bf16.mxu0 0
  %825 = vmatpush2.bf16.msra.mxu0 0
  %826 = vmatprep.subr.bf16.mxu0 0
  %827 = vmatpush2.bf16.msra.mxu0 0
  %828 = vmatprep.mubr.bf16.mxu0 0
  %829 = vmatmul.mubr.bf16.gmra.mxu0 %v794
  %v830 = vpop.f32.mrf.mxu0
  %v831 = vadd.f32 0.0, %v830
  %v832 = vpop.f32.mrf.mxu0
  %v833 = vadd.f32 0.0, %v832
  %v834 = vpop.f32.mrf.mxu0
  %v835 = vpop.f32.mrf.mxu0
  %836 = vdwg.mxu0
  %v837 = vadd.f32 %v833, %v785
  %v838 = vadd.f32 %v837, %v367
  %v839 = vmul.f32 %v838, 0.5
  %v841 = vrot.slane %v838, 6
  %v843 = vsel %vm224, %v839, %v841
  %v844 = vtanh.pop %v843
  %v845 = vmul.f32 %v844, 0.5
  %v846 = vadd.f32 %v845, 0.5
  %v847 = vmul.f32 %v846, %v703
  %v849 = vrot.slane %v844, 2
  %850 = vrot.lane.b32.xlu0 %v849, 64
  %v851 = vpop.permute.xlu0 %850
  %v853 = vmul.f32 %v846, %v851
  %855 = vrot.lane.b32.xlu0 %v853, 32
  %v856 = vpop.permute.xlu0 %855
  %v858 = vadd.f32 %v847, %v856
  %v859 = vtanh.pop %v858
  %861 = vrot.lane.b32.xlu0 %v859, 64
  %v862 = vpop.permute.xlu0 %861
  %v864 = vmul.f32 %v846, %v862
  %v865 = vpack.c.bf16 %v864, %v864
  %867 = vrot.lane.b32.xlu0 %v864, 32
  %v868 = vpop.permute.xlu0 %867
  %870 = vst.msk [vmem:[#allocation2 + $0x6] sm:$0x3] %vm404, %v868
  %v871 = vadd.f32 %v149, %v831
  %v872 = vmul.f32 %v871, 0.5
  %v874 = vrot.slane %v871, 6
  %v876 = vsel %vm224, %v872, %v874
  %v877 = vtanh.pop %v876
  %v878 = vmul.f32 %v877, 0.5
  %v879 = vadd.f32 %v878, 0.5
  %v880 = vmul.f32 %v879, %v736
  %v882 = vrot.slane %v877, 2
  %883 = vrot.lane.b32.xlu0 %v882, 64
  %v884 = vpop.permute.xlu0 %883
  %v886 = vmul.f32 %v879, %v884
  %888 = vrot.lane.b32.xlu0 %v886, 32
  %v889 = vpop.permute.xlu0 %888
  %v891 = vadd.f32 %v880, %v889
  %v892 = vtanh.pop %v891
  %894 = vrot.lane.b32.xlu0 %v892, 64
  %v895 = vpop.permute.xlu0 %894
  %v897 = vmul.f32 %v879, %v895
  %v898 = vpack.c.bf16 %v897, %v897
  %900 = vrot.lane.b32.xlu0 %v865, 32
  %v901 = vpop.permute.xlu0 %900
  %v903 = vsel %vm85, %v901, 0
  %905 = vmatprep.subr.bf16.mxu0 0
  %906 = vmatpush1.bf16.msra.mxu0 0
  %907 = vmatprep.subr.bf16.mxu0 0
  %908 = vmatpush1.bf16.msra.mxu0 0
  %909 = vmatprep.subr.bf16.mxu0 0
  %910 = vmatpush1.bf16.msra.mxu0 0
  %911 = vmatprep.subr.bf16.mxu0 0
  %912 = vmatpush1.bf16.msra.mxu0 0
  %913 = vmatprep.subr.bf16.mxu0 0
  %914 = vmatpush1.bf16.msra.mxu0 0
  %915 = vmatprep.subr.bf16.mxu0 0
  %916 = vmatpush1.bf16.msra.mxu0 0
  %917 = vmatprep.subr.bf16.mxu0 0
  %918 = vmatpush1.bf16.msra.mxu0 %v262
  %919 = vmatprep.subr.bf16.mxu0 0
  %920 = vmatpush1.bf16.msra.mxu0 %v261
  %921 = vmatprep.subr.bf16.mxu0 0
  %922 = vmatpush2.bf16.msra.mxu0 0
  %923 = vmatprep.subr.bf16.mxu0 0
  %924 = vmatpush2.bf16.msra.mxu0 0
  %925 = vmatprep.subr.bf16.mxu0 0
  %926 = vmatpush2.bf16.msra.mxu0 0
  %927 = vmatprep.subr.bf16.mxu0 0
  %928 = vmatpush2.bf16.msra.mxu0 0
  %929 = vmatprep.subr.bf16.mxu0 0
  %930 = vmatpush2.bf16.msra.mxu0 0
  %931 = vmatprep.subr.bf16.mxu0 0
  %932 = vmatpush2.bf16.msra.mxu0 0
  %933 = vmatprep.subr.bf16.mxu0 0
  %934 = vmatpush2.bf16.msra.mxu0 0
  %935 = vmatprep.subr.bf16.mxu0 0
  %936 = vmatpush2.bf16.msra.mxu0 0
  %937 = vmatprep.mubr.bf16.mxu0 0
  %938 = vmatmul.mubr.bf16.gmra.mxu0 %v903
  %v939 = vpop.f32.mrf.mxu0
  %v940 = vadd.f32 0.0, %v939
  %v941 = vpop.f32.mrf.mxu0
  %v942 = vpop.f32.mrf.mxu0
  %v943 = vpop.f32.mrf.mxu0
  %944 = vdwg.mxu0
  %946 = vrot.lane.b32.xlu0 %v898, 32
  %v947 = vpop.permute.xlu0 %946
  %v949 = vsel %vm85, %v947, 0
  %951 = vmatprep.subr.bf16.mxu0 0
  %952 = vmatpush1.bf16.msra.mxu0 0
  %953 = vmatprep.subr.bf16.mxu0 0
  %954 = vmatpush1.bf16.msra.mxu0 0
  %955 = vmatprep.subr.bf16.mxu0 0
  %956 = vmatpush1.bf16.msra.mxu0 0
  %957 = vmatprep.subr.bf16.mxu0 0
  %958 = vmatpush1.bf16.msra.mxu0 0
  %959 = vmatprep.subr.bf16.mxu0 0
  %960 = vmatpush1.bf16.msra.mxu0 0
  %961 = vmatprep.subr.bf16.mxu0 0
  %962 = vmatpush1.bf16.msra.mxu0 0
  %963 = vmatprep.subr.bf16.mxu0 %v316
  %964 = vmatpush1.bf16.msra.mxu0 %v173
  %965 = vmatprep.subr.bf16.mxu0 %v315
  %966 = vmatpush1.bf16.msra.mxu0 %v172
  %967 = vmatprep.subr.bf16.mxu0 0
  %968 = vmatpush2.bf16.msra.mxu0 0
  %969 = vmatprep.subr.bf16.mxu0 0
  %970 = vmatpush2.bf16.msra.mxu0 0
  %971 = vmatprep.subr.bf16.mxu0 0
  %972 = vmatpush2.bf16.msra.mxu0 0
  %973 = vmatprep.subr.bf16.mxu0 0
  %974 = vmatpush2.bf16.msra.mxu0 0
  %975 = vmatprep.subr.bf16.mxu0 0
  %976 = vmatpush2.bf16.msra.mxu0 0
  %977 = vmatprep.subr.bf16.mxu0 0
  %978 = vmatpush2.bf16.msra.mxu0 0
  %979 = vmatprep.subr.bf16.mxu0 0
  %980 = vmatpush2.bf16.msra.mxu0 0
  %981 = vmatprep.subr.bf16.mxu0 0
  %982 = vmatpush2.bf16.msra.mxu0 0
  %983 = vmatprep.mubr.bf16.mxu0 0
  %984 = vmatmul.mubr.bf16.gmra.mxu0 %v949
  %v985 = vpop.f32.mrf.mxu0
  %v986 = vadd.f32 0.0, %v985
  %v987 = vpop.f32.mrf.mxu0
  %v988 = vadd.f32 0.0, %v987
  %v989 = vpop.f32.mrf.mxu0
  %v990 = vpop.f32.mrf.mxu0
  %991 = vdwg.mxu0
  %v992 = vadd.f32 %v988, %v940
  %v993 = vadd.f32 %v992, %v367
  %v994 = vmul.f32 %v993, 0.5
  %v996 = vrot.slane %v993, 6
  %v998 = vsel %vm224, %v994, %v996
  %v999 = vtanh.pop %v998
  %v1000 = vmul.f32 %v999, 0.5
  %v1001 = vadd.f32 %v1000, 0.5
  %v1002 = vmul.f32 %v1001, %v858
  %v1004 = vrot.slane %v999, 2
  %1005 = vrot.lane.b32.xlu0 %v1004, 64
  %v1006 = vpop.permute.xlu0 %1005
  %v1008 = vmul.f32 %v1001, %v1006
  %1010 = vrot.lane.b32.xlu0 %v1008, 32
  %v1011 = vpop.permute.xlu0 %1010
  %v1013 = vadd.f32 %v1002, %v1011
  %v1014 = vtanh.pop %v1013
  %1016 = vrot.lane.b32.xlu0 %v1014, 64
  %v1017 = vpop.permute.xlu0 %1016
  %v1019 = vmul.f32 %v1001, %v1017
  %v1020 = vpack.c.bf16 %v1019, %v1019
  %1022 = vrot.lane.b32.xlu0 %v1019, 32
  %v1023 = vpop.permute.xlu0 %1022
  %1025 = vst.msk [vmem:[#allocation2 + $0x8] sm:$0x3] %vm404, %v1023
  %v1026 = vadd.f32 %v152, %v986
  %v1027 = vmul.f32 %v1026, 0.5
  %v1029 = vrot.slane %v1026, 6
  %v1031 = vsel %vm224, %v1027, %v1029
  %v1032 = vtanh.pop %v1031
  %v1033 = vmul.f32 %v1032, 0.5
  %v1034 = vadd.f32 %v1033, 0.5
  %v1035 = vmul.f32 %v1034, %v891
  %v1037 = vrot.slane %v1032, 2
  %1038 = vrot.lane.b32.xlu0 %v1037, 64
  %v1039 = vpop.permute.xlu0 %1038
  %v1041 = vmul.f32 %v1034, %v1039
  %1043 = vrot.lane.b32.xlu0 %v1041, 32
  %v1044 = vpop.permute.xlu0 %1043
  %v1046 = vadd.f32 %v1035, %v1044
  %v1047 = vtanh.pop %v1046
  %1049 = vrot.lane.b32.xlu0 %v1047, 64
  %v1050 = vpop.permute.xlu0 %1049
  %v1052 = vmul.f32 %v1034, %v1050
  %v1053 = vpack.c.bf16 %v1052, %v1052
  %1055 = vrot.lane.b32.xlu0 %v1020, 32
  %v1056 = vpop.permute.xlu0 %1055
  %v1058 = vsel %vm85, %v1056, 0
  %1060 = vmatprep.subr.bf16.mxu0 0
  %1061 = vmatpush1.bf16.msra.mxu0 0
  %1062 = vmatprep.subr.bf16.mxu0 0
  %1063 = vmatpush1.bf16.msra.mxu0 0
  %1064 = vmatprep.subr.bf16.mxu0 0
  %1065 = vmatpush1.bf16.msra.mxu0 0
  %1066 = vmatprep.subr.bf16.mxu0 0
  %1067 = vmatpush1.bf16.msra.mxu0 0
  %1068 = vmatprep.subr.bf16.mxu0 0
  %1069 = vmatpush1.bf16.msra.mxu0 0
  %1070 = vmatprep.subr.bf16.mxu0 0
  %1071 = vmatpush1.bf16.msra.mxu0 0
  %1072 = vmatprep.subr.bf16.mxu0 0
  %1073 = vmatpush1.bf16.msra.mxu0 %v262
  %1074 = vmatprep.subr.bf16.mxu0 0
  %1075 = vmatpush1.bf16.msra.mxu0 %v261
  %1076 = vmatprep.subr.bf16.mxu0 0
  %1077 = vmatpush2.bf16.msra.mxu0 0
  %1078 = vmatprep.subr.bf16.mxu0 0
  %1079 = vmatpush2.bf16.msra.mxu0 0
  %1080 = vmatprep.subr.bf16.mxu0 0
  %1081 = vmatpush2.bf16.msra.mxu0 0
  %1082 = vmatprep.subr.bf16.mxu0 0
  %1083 = vmatpush2.bf16.msra.mxu0 0
  %1084 = vmatprep.subr.bf16.mxu0 0
  %1085 = vmatpush2.bf16.msra.mxu0 0
  %1086 = vmatprep.subr.bf16.mxu0 0
  %1087 = vmatpush2.bf16.msra.mxu0 0
  %1088 = vmatprep.subr.bf16.mxu0 0
  %1089 = vmatpush2.bf16.msra.mxu0 0
  %1090 = vmatprep.subr.bf16.mxu0 0
  %1091 = vmatpush2.bf16.msra.mxu0 0
  %1092 = vmatprep.mubr.bf16.mxu0 0
  %1093 = vmatmul.mubr.bf16.gmra.mxu0 %v1058
  %v1094 = vpop.f32.mrf.mxu0
  %v1095 = vadd.f32 0.0, %v1094
  %v1096 = vpop.f32.mrf.mxu0
  %v1097 = vpop.f32.mrf.mxu0
  %v1098 = vpop.f32.mrf.mxu0
  %1099 = vdwg.mxu0
  %1101 = vrot.lane.b32.xlu0 %v1053, 32
  %v1102 = vpop.permute.xlu0 %1101
  %v1104 = vsel %vm85, %v1102, 0
  %1106 = vmatprep.subr.bf16.mxu0 0
  %1107 = vmatpush1.bf16.msra.mxu0 0
  %1108 = vmatprep.subr.bf16.mxu0 0
  %1109 = vmatpush1.bf16.msra.mxu0 0
  %1110 = vmatprep.subr.bf16.mxu0 0
  %1111 = vmatpush1.bf16.msra.mxu0 0
  %1112 = vmatprep.subr.bf16.mxu0 0
  %1113 = vmatpush1.bf16.msra.mxu0 0
  %1114 = vmatprep.subr.bf16.mxu0 0
  %1115 = vmatpush1.bf16.msra.mxu0 0
  %1116 = vmatprep.subr.bf16.mxu0 0
  %1117 = vmatpush1.bf16.msra.mxu0 0
  %1118 = vmatprep.subr.bf16.mxu0 %v316
  %1119 = vmatpush1.bf16.msra.mxu0 %v173
  %1120 = vmatprep.subr.bf16.mxu0 %v315
  %1121 = vmatpush1.bf16.msra.mxu0 %v172
  %1122 = vmatprep.subr.bf16.mxu0 0
  %1123 = vmatpush2.bf16.msra.mxu0 0
  %1124 = vmatprep.subr.bf16.mxu0 0
  %1125 = vmatpush2.bf16.msra.mxu0 0
  %1126 = vmatprep.subr.bf16.mxu0 0
  %1127 = vmatpush2.bf16.msra.mxu0 0
  %1128 = vmatprep.subr.bf16.mxu0 0
  %1129 = vmatpush2.bf16.msra.mxu0 0
  %1130 = vmatprep.subr.bf16.mxu0 0
  %1131 = vmatpush2.bf16.msra.mxu0 0
  %1132 = vmatprep.subr.bf16.mxu0 0
  %1133 = vmatpush2.bf16.msra.mxu0 0
  %1134 = vmatprep.subr.bf16.mxu0 0
  %1135 = vmatpush2.bf16.msra.mxu0 0
  %1136 = vmatprep.subr.bf16.mxu0 0
  %1137 = vmatpush2.bf16.msra.mxu0 0
  %1138 = vmatprep.mubr.bf16.mxu0 0
  %1139 = vmatmul.mubr.bf16.gmra.mxu0 %v1104
  %v1140 = vpop.f32.mrf.mxu0
  %v1141 = vadd.f32 0.0, %v1140
  %v1142 = vpop.f32.mrf.mxu0
  %v1143 = vadd.f32 0.0, %v1142
  %v1144 = vpop.f32.mrf.mxu0
  %v1145 = vpop.f32.mrf.mxu0
  %1146 = vdwg.mxu0
  %v1147 = vadd.f32 %v1143, %v1095
  %v1148 = vadd.f32 %v1147, %v367
  %v1149 = vmul.f32 %v1148, 0.5
  %v1151 = vrot.slane %v1148, 6
  %v1153 = vsel %vm224, %v1149, %v1151
  %v1154 = vtanh.pop %v1153
  %v1155 = vmul.f32 %v1154, 0.5
  %v1156 = vadd.f32 %v1155, 0.5
  %v1157 = vmul.f32 %v1156, %v1013
  %v1159 = vrot.slane %v1154, 2
  %1160 = vrot.lane.b32.xlu0 %v1159, 64
  %v1161 = vpop.permute.xlu0 %1160
  %v1163 = vmul.f32 %v1156, %v1161
  %1165 = vrot.lane.b32.xlu0 %v1163, 32
  %v1166 = vpop.permute.xlu0 %1165
  %v1168 = vadd.f32 %v1157, %v1166
  %v1169 = vtanh.pop %v1168
  %1171 = vrot.lane.b32.xlu0 %v1169, 64
  %v1172 = vpop.permute.xlu0 %1171
  %v1174 = vmul.f32 %v1156, %v1172
  %v1175 = vpack.c.bf16 %v1174, %v1174
  %1177 = vrot.lane.b32.xlu0 %v1174, 32
  %v1178 = vpop.permute.xlu0 %1177
  %1180 = vst.msk [vmem:[#allocation2 + $0xa] sm:$0x3] %vm404, %v1178
  %v1181 = vadd.f32 %v157, %v1141
  %v1182 = vmul.f32 %v1181, 0.5
  %v1184 = vrot.slane %v1181, 6
  %v1186 = vsel %vm224, %v1182, %v1184
  %v1187 = vtanh.pop %v1186
  %v1188 = vmul.f32 %v1187, 0.5
  %v1189 = vadd.f32 %v1188, 0.5
  %v1190 = vmul.f32 %v1189, %v1046
  %v1192 = vrot.slane %v1187, 2
  %1193 = vrot.lane.b32.xlu0 %v1192, 64
  %v1194 = vpop.permute.xlu0 %1193
  %v1196 = vmul.f32 %v1189, %v1194
  %1198 = vrot.lane.b32.xlu0 %v1196, 32
  %v1199 = vpop.permute.xlu0 %1198
  %v1201 = vadd.f32 %v1190, %v1199
  %v1202 = vtanh.pop %v1201
  %1204 = vrot.lane.b32.xlu0 %v1202, 64
  %v1205 = vpop.permute.xlu0 %1204
  %v1207 = vmul.f32 %v1189, %v1205
  %v1208 = vpack.c.bf16 %v1207, %v1207
  %1210 = vrot.lane.b32.xlu0 %v1175, 32
  %v1211 = vpop.permute.xlu0 %1210
  %v1213 = vsel %vm85, %v1211, 0
  %1215 = vmatprep.subr.bf16.mxu0 0
  %1216 = vmatpush1.bf16.msra.mxu0 0
  %1217 = vmatprep.subr.bf16.mxu0 0
  %1218 = vmatpush1.bf16.msra.mxu0 0
  %1219 = vmatprep.subr.bf16.mxu0 0
  %1220 = vmatpush1.bf16.msra.mxu0 0
  %1221 = vmatprep.subr.bf16.mxu0 0
  %1222 = vmatpush1.bf16.msra.mxu0 0
  %1223 = vmatprep.subr.bf16.mxu0 0
  %1224 = vmatpush1.bf16.msra.mxu0 0
  %1225 = vmatprep.subr.bf16.mxu0 0
  %1226 = vmatpush1.bf16.msra.mxu0 0
  %1227 = vmatprep.subr.bf16.mxu0 0
  %1228 = vmatpush1.bf16.msra.mxu0 %v262
  %1229 = vmatprep.subr.bf16.mxu0 0
  %1230 = vmatpush1.bf16.msra.mxu0 %v261
  %1231 = vmatprep.subr.bf16.mxu0 0
  %1232 = vmatpush2.bf16.msra.mxu0 0
  %1233 = vmatprep.subr.bf16.mxu0 0
  %1234 = vmatpush2.bf16.msra.mxu0 0
  %1235 = vmatprep.subr.bf16.mxu0 0
  %1236 = vmatpush2.bf16.msra.mxu0 0
  %1237 = vmatprep.subr.bf16.mxu0 0
  %1238 = vmatpush2.bf16.msra.mxu0 0
  %1239 = vmatprep.subr.bf16.mxu0 0
  %1240 = vmatpush2.bf16.msra.mxu0 0
  %1241 = vmatprep.subr.bf16.mxu0 0
  %1242 = vmatpush2.bf16.msra.mxu0 0
  %1243 = vmatprep.subr.bf16.mxu0 0
  %1244 = vmatpush2.bf16.msra.mxu0 0
  %1245 = vmatprep.subr.bf16.mxu0 0
  %1246 = vmatpush2.bf16.msra.mxu0 0
  %1247 = vmatprep.mubr.bf16.mxu0 0
  %1248 = vmatmul.mubr.bf16.gmra.mxu0 %v1213
  %v1249 = vpop.f32.mrf.mxu0
  %v1250 = vadd.f32 0.0, %v1249
  %v1251 = vpop.f32.mrf.mxu0
  %v1252 = vpop.f32.mrf.mxu0
  %v1253 = vpop.f32.mrf.mxu0
  %1254 = vdwg.mxu0
  %1256 = vrot.lane.b32.xlu0 %v1208, 32
  %v1257 = vpop.permute.xlu0 %1256
  %v1259 = vsel %vm85, %v1257, 0
  %1261 = vmatprep.subr.bf16.mxu0 0
  %1262 = vmatpush1.bf16.msra.mxu0 0
  %1263 = vmatprep.subr.bf16.mxu0 0
  %1264 = vmatpush1.bf16.msra.mxu0 0
  %1265 = vmatprep.subr.bf16.mxu0 0
  %1266 = vmatpush1.bf16.msra.mxu0 0
  %1267 = vmatprep.subr.bf16.mxu0 0
  %1268 = vmatpush1.bf16.msra.mxu0 0
  %1269 = vmatprep.subr.bf16.mxu0 0
  %1270 = vmatpush1.bf16.msra.mxu0 0
  %1271 = vmatprep.subr.bf16.mxu0 0
  %1272 = vmatpush1.bf16.msra.mxu0 0
  %1273 = vmatprep.subr.bf16.mxu0 %v316
  %1274 = vmatpush1.bf16.msra.mxu0 %v173
  %1275 = vmatprep.subr.bf16.mxu0 %v315
  %1276 = vmatpush1.bf16.msra.mxu0 %v172
  %1277 = vmatprep.subr.bf16.mxu0 0
  %1278 = vmatpush2.bf16.msra.mxu0 0
  %1279 = vmatprep.subr.bf16.mxu0 0
  %1280 = vmatpush2.bf16.msra.mxu0 0
  %1281 = vmatprep.subr.bf16.mxu0 0
  %1282 = vmatpush2.bf16.msra.mxu0 0
  %1283 = vmatprep.subr.bf16.mxu0 0
  %1284 = vmatpush2.bf16.msra.mxu0 0
  %1285 = vmatprep.subr.bf16.mxu0 0
  %1286 = vmatpush2.bf16.msra.mxu0 0
  %1287 = vmatprep.subr.bf16.mxu0 0
  %1288 = vmatpush2.bf16.msra.mxu0 0
  %1289 = vmatprep.subr.bf16.mxu0 0
  %1290 = vmatpush2.bf16.msra.mxu0 0
  %1291 = vmatprep.subr.bf16.mxu0 0
  %1292 = vmatpush2.bf16.msra.mxu0 0
  %1293 = vmatprep.mubr.bf16.mxu0 0
  %1294 = vmatmul.mubr.bf16.gmra.mxu0 %v1259
  %v1295 = vpop.f32.mrf.mxu0
  %v1296 = vadd.f32 0.0, %v1295
  %v1297 = vpop.f32.mrf.mxu0
  %v1298 = vadd.f32 0.0, %v1297
  %v1299 = vpop.f32.mrf.mxu0
  %v1300 = vpop.f32.mrf.mxu0
  %1301 = vdwg.mxu0
  %v1302 = vadd.f32 %v1298, %v1250
  %v1303 = vadd.f32 %v1302, %v367
  %v1304 = vmul.f32 %v1303, 0.5
  %v1306 = vrot.slane %v1303, 6
  %v1308 = vsel %vm224, %v1304, %v1306
  %v1309 = vtanh.pop %v1308
  %v1310 = vmul.f32 %v1309, 0.5
  %v1311 = vadd.f32 %v1310, 0.5
  %v1312 = vmul.f32 %v1311, %v1168
  %v1314 = vrot.slane %v1309, 2
  %1315 = vrot.lane.b32.xlu0 %v1314, 64
  %v1316 = vpop.permute.xlu0 %1315
  %v1318 = vmul.f32 %v1311, %v1316
  %1320 = vrot.lane.b32.xlu0 %v1318, 32
  %v1321 = vpop.permute.xlu0 %1320
  %v1323 = vadd.f32 %v1312, %v1321
  %v1324 = vtanh.pop %v1323
  %1326 = vrot.lane.b32.xlu0 %v1324, 64
  %v1327 = vpop.permute.xlu0 %1326
  %v1329 = vmul.f32 %v1311, %v1327
  %v1330 = vpack.c.bf16 %v1329, %v1329
  %1332 = vrot.lane.b32.xlu0 %v1329, 32
  %v1333 = vpop.permute.xlu0 %1332
  %1335 = vst.msk [vmem:[#allocation2 + $0xc] sm:$0x3] %vm404, %v1333
  %v1336 = vadd.f32 %v160, %v1296
  %v1337 = vmul.f32 %v1336, 0.5
  %v1339 = vrot.slane %v1336, 6
  %v1341 = vsel %vm224, %v1337, %v1339
  %v1342 = vtanh.pop %v1341
  %v1343 = vmul.f32 %v1342, 0.5
  %v1344 = vadd.f32 %v1343, 0.5
  %v1345 = vmul.f32 %v1344, %v1201
  %v1347 = vrot.slane %v1342, 2
  %1348 = vrot.lane.b32.xlu0 %v1347, 64
  %v1349 = vpop.permute.xlu0 %1348
  %v1351 = vmul.f32 %v1344, %v1349
  %1353 = vrot.lane.b32.xlu0 %v1351, 32
  %v1354 = vpop.permute.xlu0 %1353
  %v1356 = vadd.f32 %v1345, %v1354
  %v1357 = vtanh.pop %v1356
  %1359 = vrot.lane.b32.xlu0 %v1357, 64
  %v1360 = vpop.permute.xlu0 %1359
  %v1362 = vmul.f32 %v1344, %v1360
  %v1363 = vpack.c.bf16 %v1362, %v1362
  %1365 = vrot.lane.b32.xlu0 %v1330, 32
  %v1366 = vpop.permute.xlu0 %1365
  %v1368 = vsel %vm85, %v1366, 0
  %1370 = vmatprep.subr.bf16.mxu0 0
  %1371 = vmatpush1.bf16.msra.mxu0 0
  %1372 = vmatprep.subr.bf16.mxu0 0
  %1373 = vmatpush1.bf16.msra.mxu0 0
  %1374 = vmatprep.subr.bf16.mxu0 0
  %1375 = vmatpush1.bf16.msra.mxu0 0
  %1376 = vmatprep.subr.bf16.mxu0 0
  %1377 = vmatpush1.bf16.msra.mxu0 0
  %1378 = vmatprep.subr.bf16.mxu0 0
  %1379 = vmatpush1.bf16.msra.mxu0 0
  %1380 = vmatprep.subr.bf16.mxu0 0
  %1381 = vmatpush1.bf16.msra.mxu0 0
  %1382 = vmatprep.subr.bf16.mxu0 0
  %1383 = vmatpush1.bf16.msra.mxu0 %v262
  %1384 = vmatprep.subr.bf16.mxu0 0
  %1385 = vmatpush1.bf16.msra.mxu0 %v261
  %1386 = vmatprep.subr.bf16.mxu0 0
  %1387 = vmatpush2.bf16.msra.mxu0 0
  %1388 = vmatprep.subr.bf16.mxu0 0
  %1389 = vmatpush2.bf16.msra.mxu0 0
  %1390 = vmatprep.subr.bf16.mxu0 0
  %1391 = vmatpush2.bf16.msra.mxu0 0
  %1392 = vmatprep.subr.bf16.mxu0 0
  %1393 = vmatpush2.bf16.msra.mxu0 0
  %1394 = vmatprep.subr.bf16.mxu0 0
  %1395 = vmatpush2.bf16.msra.mxu0 0
  %1396 = vmatprep.subr.bf16.mxu0 0
  %1397 = vmatpush2.bf16.msra.mxu0 0
  %1398 = vmatprep.subr.bf16.mxu0 0
  %1399 = vmatpush2.bf16.msra.mxu0 0
  %1400 = vmatprep.subr.bf16.mxu0 0
  %1401 = vmatpush2.bf16.msra.mxu0 0
  %1402 = vmatprep.mubr.bf16.mxu0 0
  %1403 = vmatmul.mubr.bf16.gmra.mxu0 %v1368
  %v1404 = vpop.f32.mrf.mxu0
  %v1405 = vadd.f32 0.0, %v1404
  %v1406 = vpop.f32.mrf.mxu0
  %v1407 = vpop.f32.mrf.mxu0
  %v1408 = vpop.f32.mrf.mxu0
  %1409 = vdwg.mxu0
  %1411 = vrot.lane.b32.xlu0 %v1363, 32
  %v1412 = vpop.permute.xlu0 %1411
  %v1414 = vsel %vm85, %v1412, 0
  %1416 = vmatprep.subr.bf16.mxu0 0
  %1417 = vmatpush1.bf16.msra.mxu0 0
  %1418 = vmatprep.subr.bf16.mxu0 0
  %1419 = vmatpush1.bf16.msra.mxu0 0
  %1420 = vmatprep.subr.bf16.mxu0 0
  %1421 = vmatpush1.bf16.msra.mxu0 0
  %1422 = vmatprep.subr.bf16.mxu0 0
  %1423 = vmatpush1.bf16.msra.mxu0 0
  %1424 = vmatprep.subr.bf16.mxu0 0
  %1425 = vmatpush1.bf16.msra.mxu0 0
  %1426 = vmatprep.subr.bf16.mxu0 0
  %1427 = vmatpush1.bf16.msra.mxu0 0
  %1428 = vmatprep.subr.bf16.mxu0 0
  %1429 = vmatpush1.bf16.msra.mxu0 %v316
  %1430 = vmatprep.subr.bf16.mxu0 0
  %1431 = vmatpush1.bf16.msra.mxu0 %v315
  %1432 = vmatprep.subr.bf16.mxu0 0
  %1433 = vmatpush2.bf16.msra.mxu0 0
  %1434 = vmatprep.subr.bf16.mxu0 0
  %1435 = vmatpush2.bf16.msra.mxu0 0
  %1436 = vmatprep.subr.bf16.mxu0 0
  %1437 = vmatpush2.bf16.msra.mxu0 0
  %1438 = vmatprep.subr.bf16.mxu0 0
  %1439 = vmatpush2.bf16.msra.mxu0 0
  %1440 = vmatprep.subr.bf16.mxu0 0
  %1441 = vmatpush2.bf16.msra.mxu0 0
  %1442 = vmatprep.subr.bf16.mxu0 0
  %1443 = vmatpush2.bf16.msra.mxu0 0
  %1444 = vmatprep.subr.bf16.mxu0 0
  %1445 = vmatpush2.bf16.msra.mxu0 0
  %1446 = vmatprep.subr.bf16.mxu0 0
  %1447 = vmatpush2.bf16.msra.mxu0 0
  %1448 = vmatprep.mubr.bf16.mxu0 0
  %1449 = vmatmul.mubr.bf16.gmra.mxu0 %v1414
  %v1450 = vpop.f32.mrf.mxu0
  %v1451 = vadd.f32 %v1405, %v1450
  %v1452 = vpop.f32.mrf.mxu0
  %v1453 = vpop.f32.mrf.mxu0
  %v1454 = vpop.f32.mrf.mxu0
  %1455 = vdwg.mxu0
  %v1456 = vadd.f32 %v1451, %v367
  %v1457 = vmul.f32 %v1456, 0.5
  %v1459 = vrot.slane %v1456, 6
  %v1461 = vsel %vm224, %v1457, %v1459
  %v1462 = vtanh.pop %v1461
  %v1463 = vmul.f32 %v1462, 0.5
  %v1464 = vadd.f32 %v1463, 0.5
  %v1465 = vmul.f32 %v1464, %v1323
  %v1467 = vrot.slane %v1462, 2
  %1468 = vrot.lane.b32.xlu0 %v1467, 64
  %v1469 = vpop.permute.xlu0 %1468
  %v1471 = vmul.f32 %v1464, %v1469
  %1473 = vrot.lane.b32.xlu0 %v1471, 32
  %v1474 = vpop.permute.xlu0 %1473
  %v1476 = vadd.f32 %v1465, %v1474
  %v1477 = vtanh.pop %v1476
  %1479 = vrot.lane.b32.xlu0 %v1477, 64
  %v1480 = vpop.permute.xlu0 %1479
  %v1482 = vmul.f32 %v1464, %v1480
  %1484 = vrot.lane.b32.xlu0 %v1482, 32
  %v1485 = vpop.permute.xlu0 %1484
  %1487 = vst.msk [vmem:[#allocation2 + $0xe] sm:$0x3] %vm404, %v1485
  %v1488 = vld [vmem:[#allocation2] sm:$0xff]
  %v1489 = vld [vmem:[#allocation2 + $0x8] sm:$0xff]
  %v1490 = vpack.c.bf16 %v1489, %v1488
  %v1491 = vlaneseq
  %v1492 = vshrl.u32 %v1491, 7
  %v1493 = vsub.s32 0, %v1492
  %v1494 = vrot.slane %v36, %v1493
  %v1499 = vunpack.c.l.b16 %v30
  %v1500 = vunpack.c.l.b16 %v31
  %v1501 = vunpack.c.l.b16 %v32
  %v1502 = vunpack.c.l.b16 %v33
  %v1503 = vpack.c.b16 %v1500, %v1499
  %v1504 = vpack.c.b16 %v1502, %v1501
  %v1508 = vsel %vm85, %v1490, 0
  %1510 = vmatprep.subr.bf16.mxu0 0
  %1511 = vmatpush1.bf16.msra.mxu0 0
  %1512 = vmatprep.subr.bf16.mxu0 0
  %1513 = vmatpush1.bf16.msra.mxu0 0
  %1514 = vmatprep.subr.bf16.mxu0 0
  %1515 = vmatpush1.bf16.msra.mxu0 0
  %1516 = vmatprep.subr.bf16.mxu0 0
  %1517 = vmatpush1.bf16.msra.mxu0 0
  %1518 = vmatprep.subr.bf16.mxu0 0
  %1519 = vmatpush1.bf16.msra.mxu0 0
  %1520 = vmatprep.subr.bf16.mxu0 0
  %1521 = vmatpush1.bf16.msra.mxu0 0
  %1522 = vmatprep.subr.bf16.mxu0 0
  %1523 = vmatpush1.bf16.msra.mxu0 %v1504
  %1524 = vmatprep.subr.bf16.mxu0 0
  %1525 = vmatpush1.bf16.msra.mxu0 %v1503
  %1526 = vmatprep.subr.bf16.mxu0 0
  %1527 = vmatpush2.bf16.msra.mxu0 0
  %1528 = vmatprep.subr.bf16.mxu0 0
  %1529 = vmatpush2.bf16.msra.mxu0 0
  %1530 = vmatprep.subr.bf16.mxu0 0
  %1531 = vmatpush2.bf16.msra.mxu0 0
  %1532 = vmatprep.subr.bf16.mxu0 0
  %1533 = vmatpush2.bf16.msra.mxu0 0
  %1534 = vmatprep.subr.bf16.mxu0 0
  %1535 = vmatpush2.bf16.msra.mxu0 0
  %1536 = vmatprep.subr.bf16.mxu0 0
  %1537 = vmatpush2.bf16.msra.mxu0 0
  %1538 = vmatprep.subr.bf16.mxu0 0
  %1539 = vmatpush2.bf16.msra.mxu0 0
  %1540 = vmatprep.subr.bf16.mxu0 0
  %1541 = vmatpush2.bf16.msra.mxu0 0
  %1542 = vmatprep.mubr.bf16.mxu0 0
  %1543 = vmatmul.mubr.bf16.gmra.mxu0 %v1508
  %v1544 = vpop.f32.mrf.mxu0
  %v1545 = vadd.f32 %v1494, %v1544
  %v1546 = vpop.f32.mrf.mxu0
  %v1547 = vpop.f32.mrf.mxu0
  %v1548 = vadd.f32 %v1494, %v1547
  %v1549 = vpop.f32.mrf.mxu0
  %1550 = vdwg.mxu0
  %1551 = vst [vmem:[%s4] sm:$0xff] %v1545
  %1552 = vst [vmem:[%s4 + $0x8] sm:$0xff] %v1548
  // Predicated region
  $region18: #{decoder_forward.1} parent=0 // pred_check
    _
  $region19: #{decoder_forward.1} parent=0 // pred_check_branch
    %1554 = sbr.rel (0) target = $region21
  $region20: #{decoder_forward.1} parent=0 // pred_region
    _
  $region21: #{decoder_forward.1} parent=0 // pred_fallthru
    _
  // Predicated region
  $region22: #{decoder_forward.1} parent=0 // pred_check
    _
  $region23: #{decoder_forward.1} parent=0 // pred_check_branch
    %1556 = sbr.rel (0) target = $region25
  $region24: #{decoder_forward.1} parent=0 // pred_region
    _
  $region25: #{decoder_forward.1} parent=0 // pred_fallthru
    _

</llo_original>
